<compile_context>
chip_gen: v6e
topology: v6e:2x2x1
jax: 0.10.0
libtpu: 0.0.40
codegen_flags: <defaults>
</compile_context>

<pallas_src>
import functools

import numpy as np
import jax
import jax.numpy as jnp
from jax.experimental import pallas as pl
from jax.experimental.pallas import tpu as pltpu

HID = 64      # hidden channels per branch
FEAT = 64     # GeoVote feature channels
ROT_K = 4     # Rot_green / Rot_red output dims
VOTE_C = 6    # vote channels
TS_K = 6      # Pose_Ts output (3 translation + 3 size)
LANES = 128

# ---- packed parameter layout: one (PACK_ROWS, 256) f32 slab --------------------------------
R_WIN = 0      # rows 0:3,     lanes 0:128  -> [gv_w1 | t_w1]                (3, 128)
R_W2 = 8       # rows 8:136,   lanes 0:128  -> blockdiag(gv_w2, t_w2)        (128, 128)
R_WF = 136     # rows 136:200, lanes 0:256  -> [gv_wv pad128 | g_w1 | r_w1]  (64, 256)
R_WR2 = 200    # rows 200:328, lanes 0:128  -> blockdiag(g_w2, r_w2)         (128, 128)
R_WR3 = 328    # rows 328:456, lanes 0:128  -> g_w3 -> lanes 0:4, r_w3 -> 4:8 (128, 128)
R_WT3 = 456    # rows 456:584, lanes 0:128  -> t_w3 in rows 520:584, cols 0:6 (128, 128)
R_BIAS = 584   # 6 bias rows (b_in, b2, b_feat, b_rot2, b_rot3, b_t3)
PACK_ROWS = 592

PARAM_SHAPES = {
    # GeoVote
    "gv_w1": (3, HID), "gv_b1": (1, HID),
    "gv_w2": (HID, FEAT), "gv_b2": (1, FEAT),
    "gv_wv": (FEAT, VOTE_C), "gv_bv": (1, VOTE_C),
    # Rot_green
    "g_w1": (FEAT, HID), "g_b1": (1, HID),
    "g_w2": (HID, HID), "g_b2": (1, HID),
    "g_w3": (HID, ROT_K), "g_b3": (1, ROT_K),
    # Rot_red
    "r_w1": (FEAT, HID), "r_b1": (1, HID),
    "r_w2": (HID, HID), "r_b2": (1, HID),
    "r_w3": (HID, ROT_K), "r_b3": (1, ROT_K),
    # Pose_Ts
    "t_w1": (3, HID), "t_b1": (1, HID),
    "t_w2": (HID, HID), "t_b2": (1, HID),
    "t_w3": (HID, TS_K), "t_b3": (1, TS_K),
}


def init_params(key):
    """Deterministic synthetic parameters (shapes implied by the reconstructed heads)."""
    params = {}
    keys = jax.random.split(key, len(PARAM_SHAPES))
    for k, (name, shp) in zip(keys, sorted(PARAM_SHAPES.items())):
        scale = 0.1 if ("_w" in name) else 0.01
        params[name] = scale * jax.random.normal(k, shp, dtype=jnp.float32)
    return params


def pack_params(params):
    """Pack all 24 tensors into one contiguous, pre-padded (PACK_ROWS, 256) f32 slab."""
    p = {k: np.asarray(v, np.float32) for k, v in params.items()}
    w = np.zeros((PACK_ROWS, 256), np.float32)
    # fused input layer on centered points: [GeoVote conv1 | Pose_Ts conv1]
    w[R_WIN:R_WIN + 3, 0:64] = p["gv_w1"]
    w[R_WIN:R_WIN + 3, 64:128] = p["t_w1"]
    # fused layer-2 (block-diagonal): [feat | ts-hidden]
    w[R_W2:R_W2 + 64, 0:64] = p["gv_w2"]
    w[R_W2 + 64:R_W2 + 128, 64:128] = p["t_w2"]
    # fused feat consumers: [vote (padded to 128 lanes) | rot_green L1 | rot_red L1]
    w[R_WF:R_WF + 64, 0:VOTE_C] = p["gv_wv"]
    w[R_WF:R_WF + 64, 128:192] = p["g_w1"]
    w[R_WF:R_WF + 64, 192:256] = p["r_w1"]
    # fused rot layer-2 (block-diagonal)
    w[R_WR2:R_WR2 + 64, 0:64] = p["g_w2"]
    w[R_WR2 + 64:R_WR2 + 128, 64:128] = p["r_w2"]
    # fused rot layer-3: green -> lanes 0:4, red -> lanes 4:8
    w[R_WR3:R_WR3 + 64, 0:4] = p["g_w3"]
    w[R_WR3 + 64:R_WR3 + 128, 4:8] = p["r_w3"]
    # ts layer-3: acts on the pooled layer-2 vector (ts-hidden sits in lanes 64:128)
    w[R_WT3 + 64:R_WT3 + 128, 0:TS_K] = p["t_w3"]
    # biases (one row each)
    w[R_BIAS + 0, 0:64] = p["gv_b1"][0]
    w[R_BIAS + 0, 64:128] = p["t_b1"][0]
    w[R_BIAS + 1, 0:64] = p["gv_b2"][0]
    w[R_BIAS + 1, 64:128] = p["t_b2"][0]
    w[R_BIAS + 2, 0:VOTE_C] = p["gv_bv"][0]
    w[R_BIAS + 2, 128:192] = p["g_b1"][0]
    w[R_BIAS + 2, 192:256] = p["r_b1"][0]
    w[R_BIAS + 3, 0:64] = p["g_b2"][0]
    w[R_BIAS + 3, 64:128] = p["r_b2"][0]
    w[R_BIAS + 4, 0:4] = p["g_b3"][0]
    w[R_BIAS + 4, 4:8] = p["r_b3"][0]
    w[R_BIAS + 5, 0:TS_K] = p["t_b3"][0]
    return jnp.asarray(w)


def _make_kernel(NB, N, vote_type):
    """One grid step processes NB batch elements as one stacked (NB*N, C) problem."""
    M = NB * N

    def kernel(pts_ref, wpk_ref, vote_ref, small_ref):
        pts = pts_ref[...]                                   # (NB, N, 3)
        mean = jnp.mean(pts, axis=1, keepdims=True)          # (NB, 1, 3) == points.mean(dim=1)
        pc = (pts - mean).reshape(M, 3)                      # centered points, stacked
        mean2 = mean.reshape(NB, 3)

        # static slices of the packed parameter slab
        w_in = wpk_ref[R_WIN:R_WIN + 3, 0:128]               # (3, 128)
        w2 = wpk_ref[R_W2:R_W2 + 128, 0:128]                 # (128, 128)
        wf = wpk_ref[R_WF:R_WF + 64, 0:256]                  # (64, 256)
        wr2 = wpk_ref[R_WR2:R_WR2 + 128, 0:128]              # (128, 128)
        wr3 = wpk_ref[R_WR3:R_WR3 + 128, 0:128]              # (128, 128)
        wt3 = wpk_ref[R_WT3:R_WT3 + 128, 0:128]              # (128, 128)
        b_in = wpk_ref[R_BIAS + 0:R_BIAS + 1, 0:128]
        b2 = wpk_ref[R_BIAS + 1:R_BIAS + 2, 0:128]
        bf = wpk_ref[R_BIAS + 2:R_BIAS + 3, 0:256]
        br2 = wpk_ref[R_BIAS + 3:R_BIAS + 4, 0:128]
        br3 = wpk_ref[R_BIAS + 4:R_BIAS + 5, 0:128]
        bt3 = wpk_ref[R_BIAS + 5:R_BIAS + 6, 0:128]

        def dot(a, b):
            return jnp.dot(a, b, preferred_element_type=jnp.float32)

        # fused input layer: [GeoVote-conv1 | Pose_Ts-conv1] on centered points
        h = jax.nn.relu(dot(pc, w_in) + b_in)                # (M, 128)
        # fused layer-2 (block-diagonal): z = [feat (64) | ts-hidden (64)]
        z = jax.nn.relu(dot(h, w2) + b2)                     # (M, 128)
        feat = z[:, 0:64]                                    # (M, 64)
        # fused feat consumers: [vote (lane-padded) | rot_green L1 | rot_red L1]
        fo = dot(feat, wf) + bf                              # (M, 256)
        vote = fo[:, 0:128]                                  # lanes 0:6 real, rest exactly 0
        rot_h = jax.nn.relu(fo[:, 128:256])                  # (M, 128) = [green | red]
        # fused rot layer-2 (block-diagonal)
        rot_h2 = jax.nn.relu(dot(rot_h, wr2) + br2)          # (M, 128)

        # per-batch max pools over the N points
        rot_pool = jnp.max(rot_h2.reshape(NB, N, 128), axis=1)   # (NB, 128)
        z_pool = jnp.max(z.reshape(NB, N, 128), axis=1)          # (NB, 128)

        rot_out = dot(rot_pool, wr3) + br3                   # (NB, 128): green @ 0:4, red @ 4:8
        ts_out = dot(z_pool, wt3) + bt3                      # (NB, 128): T @ 0:3, s @ 3:6

        # normalize green / red with (norm + 1e-6); padded lanes stay zero
        green = rot_out[:, 0:4]
        red = rot_out[:, 4:8]
        gn = jnp.sqrt(jnp.sum(green * green, axis=1, keepdims=True))
        rn = jnp.sqrt(jnp.sum(red * red, axis=1, keepdims=True))
        lane = jax.lax.broadcasted_iota(jnp.int32, (NB, 128), 1)
        scale = jnp.where(lane < 4, 1.0 / (gn + 1e-6), 1.0 / (rn + 1e-6))
        rot_norm = rot_out * scale                           # (NB, 128)

        # place mean at lanes 0:3 (Pred_T = T + mean) via a tiny selection matmul
        ri = jax.lax.broadcasted_iota(jnp.int32, (3, 128), 0)
        ci = jax.lax.broadcasted_iota(jnp.int32, (3, 128), 1)
        sel_t = (ci == ri).astype(jnp.float32)               # (3, 128)
        ts_final = ts_out + dot(mean2, sel_t)                # Pred_T @ 0:3, Pred_s @ 3:6

        # lane-dense vote output (fused vote_type==1 mean-add; static branch)
        vote3 = vote.reshape(NB, N, 128)
        if vote_type == 1:
            sel_v = ((ci == ri) | (ci == ri + 3)).astype(jnp.float32)
            vote3 = vote3 + dot(mean2, sel_v)[:, None, :]
        vote_ref[...] = vote3

        # one lane-dense slab for the four small vectors:
        #   row 0: [p_green (0:4) | p_red (4:8)], row 1: [Pred_T (0:3) | Pred_s (3:6)]
        subl = jax.lax.broadcasted_iota(jnp.int32, (NB, 8, 128), 1)
        small = jnp.where(subl == 0, rot_norm[:, None, :],
                          jnp.where(subl == 1, ts_final[:, None, :], 0.0))
        small_ref[...] = small

    return kernel


@functools.partial(jax.jit, static_argnames=("vote_type",))
def cat_posenet(points, wpk, vote_type=0):
    """points: (B, N, 3) f32; wpk: packed params. Returns (vote, p_green_R, p_red_R, Pred_T, Pred_s)."""
    B, N, _ = points.shape
    # At most 2 grid steps: keeps both TensorCores busy on v7x; each step folds a whole
    # batch chunk into one stacked matmul (removes the per-batch-element grid overhead).
    G = 2 if (B % 2 == 0 and B >= 2) else 1
    NB = B // G

    kernel = _make_kernel(NB, N, vote_type)
    vote_pad, small = pl.pallas_call(
        kernel,
        out_shape=(
            jax.ShapeDtypeStruct((B, N, LANES), jnp.float32),
            jax.ShapeDtypeStruct((B, 8, LANES), jnp.float32),
        ),
        grid=(G,),
        in_specs=[
            pl.BlockSpec((NB, N, 3), lambda g: (g, 0, 0)),
            pl.BlockSpec((PACK_ROWS, 256), lambda g: (0, 0)),   # single DMA, resident all steps
        ],
        out_specs=(
            pl.BlockSpec((NB, N, LANES), lambda g: (g, 0, 0)),
            pl.BlockSpec((NB, 8, LANES), lambda g: (g, 0, 0)),
        ),
        compiler_params=pltpu.CompilerParams(dimension_semantics=("parallel",)),
    )(points, wpk)

    vote = vote_pad[:, :, 0:VOTE_C]
    p_green = small[:, 0, 0:ROT_K]
    p_red = small[:, 0, ROT_K:2 * ROT_K]
    pred_T = small[:, 1, 0:3]
    pred_s = small[:, 1, 3:6]
    return vote, p_green, p_red, pred_T, pred_s


def cat_posenet_ref(points, params, vote_type=0):
    """Pure-JAX reference mirroring the PyTorch forward semantics."""
    mean = jnp.mean(points, axis=1, keepdims=True)
    pc = points - mean

    def mm(x, w, b):
        return jnp.matmul(x, w) + b

    h = jax.nn.relu(mm(pc, params["gv_w1"], params["gv_b1"]))
    feat = jax.nn.relu(mm(h, params["gv_w2"], params["gv_b2"]))
    vote = mm(feat, params["gv_wv"], params["gv_bv"])

    def head(x, w1, b1, w2, b2, w3, b3):
        y = jax.nn.relu(mm(x, w1, b1))
        y = jax.nn.relu(mm(y, w2, b2))
        y = jnp.max(y, axis=1)
        return jnp.matmul(y, w3) + b3[0]

    g_vec = head(feat, params["g_w1"], params["g_b1"], params["g_w2"],
                 params["g_b2"], params["g_w3"], params["g_b3"])
    r_vec = head(feat, params["r_w1"], params["r_b1"], params["r_w2"],
                 params["r_b2"], params["r_w3"], params["r_b3"])
    p_green = g_vec / (jnp.linalg.norm(g_vec, axis=1, keepdims=True) + 1e-6)
    p_red = r_vec / (jnp.linalg.norm(r_vec, axis=1, keepdims=True) + 1e-6)

    ts = head(pc, params["t_w1"], params["t_b1"], params["t_w2"],
              params["t_b2"], params["t_w3"], params["t_b3"])
    T, s = ts[:, 0:3], ts[:, 3:6]
    pred_T = T + mean[:, 0]
    if vote_type == 1:
        vote = vote.at[:, :, :3].add(mean).at[:, :, 3:].add(mean)
    return vote, p_green, p_red, pred_T, s


if __name__ == "__main__":
    key = jax.random.PRNGKey(0)
    pkey, xkey = jax.random.split(key)
    params = init_params(pkey)
    wpk = pack_params(params)

    B, N = 2, 128
    points = jax.random.normal(xkey, (B, N, 3), dtype=jnp.float32)

    ok = True
    for vt in (0, 1):
        outs = jax.block_until_ready(cat_posenet(points, wpk, vote_type=vt))
        refs = cat_posenet_ref(points, params, vote_type=vt)
        for o, r in zip(outs, refs):
            if o.shape != r.shape or not np.allclose(np.asarray(o), np.asarray(r),
                                                     rtol=5e-2, atol=5e-3):
                ok = False
                break
        if not ok:
            break

    print("KERNEL_OK" if ok else "MISMATCH")
</pallas_src>

<mosaic_0001>
module attributes {stable_mosaic.version = 11 : i64} {
  func.func @kernel(%arg0: i32, %arg1: memref<1x128x3xf32, #tpu.memory_space<vmem>>, %arg2: memref<592x256xf32, #tpu.memory_space<vmem>>, %arg3: memref<1x128x128xf32, #tpu.memory_space<vmem>>, %arg4: memref<1x8x128xf32, #tpu.memory_space<vmem>>) attributes {dimension_semantics = [#tpu.dimension_semantics<parallel>], iteration_bounds = array<i64: 2>, scalar_prefetch = 0 : i64, scratch_operands = 0 : i64, tpu.core_type = #tpu.core_type<tc>, window_params = [{transform_indices = @transform_0, window_bounds = array<i64: 1, 128, 3>}, {pipeline_mode = #tpu.pipeline_mode<synchronous>, transform_indices = @transform_1, window_bounds = array<i64: 592, 256>}, {transform_indices = @transform_2, window_bounds = array<i64: 1, 128, 128>}, {transform_indices = @transform_3, window_bounds = array<i64: 1, 8, 128>}]} {
    %c0 = arith.constant 0 : index
    %c0_0 = arith.constant 0 : index
    %c0_1 = arith.constant 0 : index
    %0 = vector.load %arg1[%c0, %c0_0, %c0_1] : memref<1x128x3xf32, #tpu.memory_space<vmem>>, vector<1x128x3xf32>
    %cst = arith.constant dense<0.000000e+00> : vector<1x3xf32>
    %1 = vector.multi_reduction <add>, %0, %cst [1] : vector<1x128x3xf32> to vector<1x3xf32>
    %2 = vector.shape_cast %1 : vector<1x3xf32> to vector<1x1x3xf32>
    %cst_2 = arith.constant 1.280000e+02 : f32
    %3 = vector.broadcast %cst_2 : f32 to vector<1x1x3xf32>
    %4 = arith.divf %2, %3 : vector<1x1x3xf32>
    %5 = vector.broadcast %4 : vector<1x1x3xf32> to vector<1x128x3xf32>
    %6 = arith.subf %0, %5 : vector<1x128x3xf32>
    %7 = vector.shape_cast %6 : vector<1x128x3xf32> to vector<128x3xf32>
    %8 = vector.shape_cast %4 : vector<1x1x3xf32> to vector<1x3xf32>
    %c0_3 = arith.constant 0 : index
    %c0_4 = arith.constant 0 : index
    %9 = vector.load %arg2[%c0_3, %c0_4] : memref<592x256xf32, #tpu.memory_space<vmem>>, vector<3x128xf32>
    %c8 = arith.constant 8 : index
    %c0_5 = arith.constant 0 : index
    %10 = vector.load %arg2[%c8, %c0_5] : memref<592x256xf32, #tpu.memory_space<vmem>>, vector<128x128xf32>
    %c136 = arith.constant 136 : index
    %c0_6 = arith.constant 0 : index
    %11 = vector.load %arg2[%c136, %c0_6] : memref<592x256xf32, #tpu.memory_space<vmem>>, vector<64x256xf32>
    %c200 = arith.constant 200 : index
    %c0_7 = arith.constant 0 : index
    %12 = vector.load %arg2[%c200, %c0_7] : memref<592x256xf32, #tpu.memory_space<vmem>>, vector<128x128xf32>
    %c328 = arith.constant 328 : index
    %c0_8 = arith.constant 0 : index
    %13 = vector.load %arg2[%c328, %c0_8] : memref<592x256xf32, #tpu.memory_space<vmem>>, vector<128x128xf32>
    %c456 = arith.constant 456 : index
    %c0_9 = arith.constant 0 : index
    %14 = vector.load %arg2[%c456, %c0_9] : memref<592x256xf32, #tpu.memory_space<vmem>>, vector<128x128xf32>
    %c584 = arith.constant 584 : index
    %c0_10 = arith.constant 0 : index
    %15 = vector.load %arg2[%c584, %c0_10] : memref<592x256xf32, #tpu.memory_space<vmem>>, vector<1x128xf32>
    %c585 = arith.constant 585 : index
    %c0_11 = arith.constant 0 : index
    %16 = vector.load %arg2[%c585, %c0_11] : memref<592x256xf32, #tpu.memory_space<vmem>>, vector<1x128xf32>
    %c586 = arith.constant 586 : index
    %c0_12 = arith.constant 0 : index
    %17 = vector.load %arg2[%c586, %c0_12] : memref<592x256xf32, #tpu.memory_space<vmem>>, vector<1x256xf32>
    %c587 = arith.constant 587 : index
    %c0_13 = arith.constant 0 : index
    %18 = vector.load %arg2[%c587, %c0_13] : memref<592x256xf32, #tpu.memory_space<vmem>>, vector<1x128xf32>
    %c588 = arith.constant 588 : index
    %c0_14 = arith.constant 0 : index
    %19 = vector.load %arg2[%c588, %c0_14] : memref<592x256xf32, #tpu.memory_space<vmem>>, vector<1x128xf32>
    %c589 = arith.constant 589 : index
    %c0_15 = arith.constant 0 : index
    %20 = vector.load %arg2[%c589, %c0_15] : memref<592x256xf32, #tpu.memory_space<vmem>>, vector<1x128xf32>
    %cst_16 = arith.constant dense<0.000000e+00> : vector<128x128xf32>
    %21 = tpu.matmul %7, %9, %cst_16 {dimension_numbers = #tpu.dot_dimension_numbers<[1], [0], [0], [1], [0, 0, 1, 1], [], []>} : vector<128x3xf32>, vector<3x128xf32>, vector<128x128xf32> -> vector<128x128xf32>
    %22 = vector.broadcast %15 : vector<1x128xf32> to vector<128x128xf32>
    %23 = arith.addf %21, %22 : vector<128x128xf32>
    %cst_17 = arith.constant 0.000000e+00 : f32
    %24 = vector.broadcast %cst_17 : f32 to vector<128x128xf32>
    %25 = arith.maximumf %23, %24 : vector<128x128xf32>
    %cst_18 = arith.constant dense<0.000000e+00> : vector<128x128xf32>
    %26 = tpu.matmul %25, %10, %cst_18 {dimension_numbers = #tpu.dot_dimension_numbers<[1], [0], [0], [1], [0, 0, 1, 1], [], []>} : vector<128x128xf32>, vector<128x128xf32>, vector<128x128xf32> -> vector<128x128xf32>
    %27 = vector.broadcast %16 : vector<1x128xf32> to vector<128x128xf32>
    %28 = arith.addf %26, %27 : vector<128x128xf32>
    %cst_19 = arith.constant 0.000000e+00 : f32
    %29 = vector.broadcast %cst_19 : f32 to vector<128x128xf32>
    %30 = arith.maximumf %28, %29 : vector<128x128xf32>
    %31 = vector.extract_strided_slice %30 {offsets = [0, 0], sizes = [128, 64], strides = [1, 1]} : vector<128x128xf32> to vector<128x64xf32>
    %cst_20 = arith.constant dense<0.000000e+00> : vector<128x256xf32>
    %32 = tpu.matmul %31, %11, %cst_20 {dimension_numbers = #tpu.dot_dimension_numbers<[1], [0], [0], [1], [0, 0, 1, 1], [], []>} : vector<128x64xf32>, vector<64x256xf32>, vector<128x256xf32> -> vector<128x256xf32>
    %33 = vector.broadcast %17 : vector<1x256xf32> to vector<128x256xf32>
    %34 = arith.addf %32, %33 : vector<128x256xf32>
    %35 = vector.extract_strided_slice %34 {offsets = [0, 0], sizes = [128, 128], strides = [1, 1]} : vector<128x256xf32> to vector<128x128xf32>
    %36 = vector.extract_strided_slice %34 {offsets = [0, 128], sizes = [128, 128], strides = [1, 1]} : vector<128x256xf32> to vector<128x128xf32>
    %cst_21 = arith.constant 0.000000e+00 : f32
    %37 = vector.broadcast %cst_21 : f32 to vector<128x128xf32>
    %38 = arith.maximumf %36, %37 : vector<128x128xf32>
    %cst_22 = arith.constant dense<0.000000e+00> : vector<128x128xf32>
    %39 = tpu.matmul %38, %12, %cst_22 {dimension_numbers = #tpu.dot_dimension_numbers<[1], [0], [0], [1], [0, 0, 1, 1], [], []>} : vector<128x128xf32>, vector<128x128xf32>, vector<128x128xf32> -> vector<128x128xf32>
    %40 = vector.broadcast %18 : vector<1x128xf32> to vector<128x128xf32>
    %41 = arith.addf %39, %40 : vector<128x128xf32>
    %cst_23 = arith.constant 0.000000e+00 : f32
    %42 = vector.broadcast %cst_23 : f32 to vector<128x128xf32>
    %43 = arith.maximumf %41, %42 : vector<128x128xf32>
    %44 = vector.shape_cast %43 : vector<128x128xf32> to vector<1x128x128xf32>
    %cst_24 = arith.constant dense<0xFF800000> : vector<1x128xf32>
    %45 = vector.multi_reduction <maximumf>, %44, %cst_24 [1] : vector<1x128x128xf32> to vector<1x128xf32>
    %46 = vector.shape_cast %30 : vector<128x128xf32> to vector<1x128x128xf32>
    %cst_25 = arith.constant dense<0xFF800000> : vector<1x128xf32>
    %47 = vector.multi_reduction <maximumf>, %46, %cst_25 [1] : vector<1x128x128xf32> to vector<1x128xf32>
    %cst_26 = arith.constant dense<0.000000e+00> : vector<1x128xf32>
    %48 = tpu.matmul %45, %13, %cst_26 {dimension_numbers = #tpu.dot_dimension_numbers<[1], [0], [0], [1], [0, 0, 1, 1], [], []>} : vector<1x128xf32>, vector<128x128xf32>, vector<1x128xf32> -> vector<1x128xf32>
    %49 = arith.addf %48, %19 : vector<1x128xf32>
    %cst_27 = arith.constant dense<0.000000e+00> : vector<1x128xf32>
    %50 = tpu.matmul %47, %14, %cst_27 {dimension_numbers = #tpu.dot_dimension_numbers<[1], [0], [0], [1], [0, 0, 1, 1], [], []>} : vector<1x128xf32>, vector<128x128xf32>, vector<1x128xf32> -> vector<1x128xf32>
    %51 = arith.addf %50, %20 : vector<1x128xf32>
    %52 = vector.extract_strided_slice %49 {offsets = [0, 0], sizes = [1, 4], strides = [1, 1]} : vector<1x128xf32> to vector<1x4xf32>
    %53 = vector.extract_strided_slice %49 {offsets = [0, 4], sizes = [1, 4], strides = [1, 1]} : vector<1x128xf32> to vector<1x4xf32>
    %54 = arith.mulf %52, %52 : vector<1x4xf32>
    %cst_28 = arith.constant dense<0.000000e+00> : vector<1xf32>
    %55 = vector.multi_reduction <add>, %54, %cst_28 [1] : vector<1x4xf32> to vector<1xf32>
    %56 = vector.shape_cast %55 : vector<1xf32> to vector<1x1xf32>
    %57 = math.sqrt %56 : vector<1x1xf32>
    %58 = arith.mulf %53, %53 : vector<1x4xf32>
    %cst_29 = arith.constant dense<0.000000e+00> : vector<1xf32>
    %59 = vector.multi_reduction <add>, %58, %cst_29 [1] : vector<1x4xf32> to vector<1xf32>
    %60 = vector.shape_cast %59 : vector<1xf32> to vector<1x1xf32>
    %61 = math.sqrt %60 : vector<1x1xf32>
    %62 = tpu.iota {dimensions = array<i32: 1>} : vector<1x128xi32>
    %c4_i32 = arith.constant 4 : i32
    %63 = vector.broadcast %c4_i32 : i32 to vector<1x128xi32>
    %64 = arith.cmpi slt, %62, %63 : vector<1x128xi32>
    %cst_30 = arith.constant 9.99999997E-7 : f32
    %65 = vector.broadcast %cst_30 : f32 to vector<1x1xf32>
    %66 = arith.addf %57, %65 : vector<1x1xf32>
    %cst_31 = arith.constant 1.000000e+00 : f32
    %67 = vector.broadcast %cst_31 : f32 to vector<1x1xf32>
    %68 = arith.divf %67, %66 : vector<1x1xf32>
    %cst_32 = arith.constant 9.99999997E-7 : f32
    %69 = vector.broadcast %cst_32 : f32 to vector<1x1xf32>
    %70 = arith.addf %61, %69 : vector<1x1xf32>
    %cst_33 = arith.constant 1.000000e+00 : f32
    %71 = vector.broadcast %cst_33 : f32 to vector<1x1xf32>
    %72 = arith.divf %71, %70 : vector<1x1xf32>
    %73 = vector.shape_cast %68 : vector<1x1xf32> to vector<1x1xf32>
    %74 = vector.broadcast %73 : vector<1x1xf32> to vector<1x128xf32>
    %75 = vector.shape_cast %72 : vector<1x1xf32> to vector<1x1xf32>
    %76 = vector.broadcast %75 : vector<1x1xf32> to vector<1x128xf32>
    %77 = arith.select %64, %74, %76 : vector<1x128xi1>, vector<1x128xf32>
    %78 = arith.mulf %49, %77 : vector<1x128xf32>
    %79 = tpu.iota {dimensions = array<i32: 0>} : vector<3x128xi32>
    %80 = tpu.iota {dimensions = array<i32: 1>} : vector<3x128xi32>
    %81 = arith.cmpi eq, %80, %79 : vector<3x128xi32>
    %82 = arith.extui %81 : vector<3x128xi1> to vector<3x128xi32>
    %83 = arith.sitofp %82 : vector<3x128xi32> to vector<3x128xf32>
    %cst_34 = arith.constant dense<0.000000e+00> : vector<1x128xf32>
    %84 = tpu.matmul %8, %83, %cst_34 {dimension_numbers = #tpu.dot_dimension_numbers<[1], [0], [0], [1], [0, 0, 1, 1], [], []>} : vector<1x3xf32>, vector<3x128xf32>, vector<1x128xf32> -> vector<1x128xf32>
    %85 = arith.addf %51, %84 : vector<1x128xf32>
    %86 = vector.shape_cast %35 : vector<128x128xf32> to vector<1x128x128xf32>
    %c0_35 = arith.constant 0 : index
    %c0_36 = arith.constant 0 : index
    %c0_37 = arith.constant 0 : index
    %87 = vector.load %arg3[%c0_35, %c0_36, %c0_37] : memref<1x128x128xf32, #tpu.memory_space<vmem>>, vector<1x128x128xf32>
    tpu.vector_store %arg3[%c0_35, %c0_36, %c0_37], %86 {strides = array<i32>} : memref<1x128x128xf32, #tpu.memory_space<vmem>>, vector<1x128x128xf32>,
    %88 = tpu.iota {dimensions = array<i32: 1>} : vector<1x8x128xi32>
    %c0_i32 = arith.constant 0 : i32
    %89 = vector.broadcast %c0_i32 : i32 to vector<1x8x128xi32>
    %90 = arith.cmpi eq, %88, %89 : vector<1x8x128xi32>
    %91 = vector.shape_cast %78 : vector<1x128xf32> to vector<1x1x128xf32>
    %c1_i32 = arith.constant 1 : i32
    %92 = vector.broadcast %c1_i32 : i32 to vector<1x8x128xi32>
    %93 = arith.cmpi eq, %88, %92 : vector<1x8x128xi32>
    %94 = vector.shape_cast %85 : vector<1x128xf32> to vector<1x1x128xf32>
    %cst_38 = arith.constant 0.000000e+00 : f32
    %95 = vector.shape_cast %94 : vector<1x1x128xf32> to vector<1x1x128xf32>
    %96 = vector.broadcast %95 : vector<1x1x128xf32> to vector<1x8x128xf32>
    %97 = vector.broadcast %cst_38 : f32 to vector<1x8x128xf32>
    %98 = arith.select %93, %96, %97 : vector<1x8x128xi1>, vector<1x8x128xf32>
    %99 = vector.shape_cast %91 : vector<1x1x128xf32> to vector<1x1x128xf32>
    %100 = vector.broadcast %99 : vector<1x1x128xf32> to vector<1x8x128xf32>
    %101 = arith.select %90, %100, %98 : vector<1x8x128xi1>, vector<1x8x128xf32>
    %c0_39 = arith.constant 0 : index
    %c0_40 = arith.constant 0 : index
    %c0_41 = arith.constant 0 : index
    %102 = vector.load %arg4[%c0_39, %c0_40, %c0_41] : memref<1x8x128xf32, #tpu.memory_space<vmem>>, vector<1x8x128xf32>
    tpu.vector_store %arg4[%c0_39, %c0_40, %c0_41], %101 {strides = array<i32>} : memref<1x8x128xf32, #tpu.memory_space<vmem>>, vector<1x8x128xf32>,
    return
  }
  func.func @transform_0(%arg0: i32) -> (i32, i32, i32) {
    %c0_i32 = arith.constant 0 : i32
    %c0_i32_0 = arith.constant 0 : i32
    %c0_i32_1 = arith.constant 0 : i32
    return %arg0, %c0_i32, %c0_i32_0 : i32, i32, i32
  }
  func.func @transform_1(%arg0: i32) -> (i32, i32) {
    %c0_i32 = arith.constant 0 : i32
    %c0_i32_0 = arith.constant 0 : i32
    %c0_i32_1 = arith.constant 0 : i32
    return %c0_i32, %c0_i32_0 : i32, i32
  }
  func.func @transform_2(%arg0: i32) -> (i32, i32, i32) {
    %c0_i32 = arith.constant 0 : i32
    %c0_i32_0 = arith.constant 0 : i32
    %c0_i32_1 = arith.constant 0 : i32
    return %arg0, %c0_i32, %c0_i32_0 : i32, i32, i32
  }
  func.func @transform_3(%arg0: i32) -> (i32, i32, i32) {
    %c0_i32 = arith.constant 0 : i32
    %c0_i32_0 = arith.constant 0 : i32
    %c0_i32_1 = arith.constant 0 : i32
    return %arg0, %c0_i32, %c0_i32_0 : i32, i32, i32
  }
}

</mosaic_0001>

<llo_original>
// kernel: cat_posenet.1
$region0: #{cat_posenet.1}
  #allocation0 [shape = 'u32[]', space=smem, size = 0x4, offset = 0x4, fixed_abs, tag = 'smem constant byte address 0x4 - core index']
  #allocation1 [shape = 'u32[144,128]{1,0:T(1,128)}', space=vmem, size = 0x12000, scoped, tag = 'internal scratch']
  %s0 = inlined_call_operand.vmem [shape: f32[2,128,3], index: 0, kind: input, shape index: {}]
  %s1 = inlined_call_operand.hbm [shape: f32[592,256], index: 1, kind: input, shape index: {}]
  %s2 = inlined_call_operand.vmem [shape: f32[2,128,128], index: 2, kind: output, shape index: {0}]
  %s3 = inlined_call_operand.vmem [shape: f32[2,8,128], index: 3, kind: output, shape index: {1}]
  %4 = xla_tuple %s2, %s3
  %s5 = sld [smem:[#allocation0]]
  $region53: #{cat_posenet.1} parent=0
    _
  %s7 = ssub.s32 1, %s5
  %s8 = scalar_select 0, %s7, %s5
  $region1: #{cat_posenet.1} parent=0
    #allocation2 [shape = 'u8[606208]{0}', space=vmem, size = 0x94000, scoped, tag = 'input window, operand 1, single buffered']
    #allocation3 [shape = 's32[2]{0}', space=sflag, size = 0x8, scoped, tag = 'scoped memory for cat_posenet.1']
    %9 = vsyncpa [#allocation3], 0
    loop: start=0, step=1, limit=4
    $region2: #{cat_posenet.1} parent=1 // loop_pre_header
      _
    $region3: #{cat_posenet.1} parent=1 // loop_header
      %s11 = sphi 0, %s15
      %p12 = scmp.ge.s32.totalorder %s11, 4
      %s21 = sphi 0, %s23
      %s24 = sphi 0, %s21
      %s25 = sphi 0, %s24
      %s41 = sphi 0, %s25
      %s45 = sphi 0, %s45
      %s47 = sphi 0, %s45
      %s48 = sphi 0, %s47
      %s62 = sphi 0, %s48
      %s68 = sphi 0, %s70
      %s71 = sphi 0, %s68
      %s72 = sphi 0, %s71
      %s88 = sphi 0, %s72
      %s94 = sphi 0, %s96
      %s97 = sphi 0, %s94
      %s98 = sphi 0, %s97
      %s114 = sphi 0, %s98
    $region4: #{cat_posenet.1} parent=1 // loop_header_branch
      %14 = sbr.rel (%p12) target = $region8
    $region5: #{cat_posenet.1} parent=1 // loop_body
      %s16 = ssub.s32 %s11, 1
      %s17 = ssub.s32 %s11, 2
      %s18 = sadd.s32 %s11, 1
      %s19 = ssub.s32 %s11, %s18
      %p20 = scmp.eq.s32.totalorder %s19, 0
      %s22 = sadd.s32 %s21, 1
      %s23 = scalar_select %p20, %s21, %s22
      %p26 = pneg %p20
      %p27 = scmp.eq.s32.totalorder %s11, 1
      %p28 = por %p26, %p27
      %p29 = scmp.ne.s32.totalorder %s21, %s24
      %p30 = scmp.eq.s32.totalorder %s11, 0
      %p31 = por %p29, %p30
      %p32 = scmp.ne.s32.totalorder %s21, %s24
      %p33 = scmp.eq.s32.totalorder %s16, 1
      %p34 = por %p32, %p33
      %p35 = scmp.ne.s32.totalorder %s24, %s25
      %p36 = scmp.eq.s32.totalorder %s16, 0
      %p37 = por %p35, %p36
      %p38 = scmp.ne.s32.totalorder %s24, %s25
      %p39 = scmp.eq.s32.totalorder %s17, 1
      %p40 = por %p38, %p39
      %p42 = scmp.ne.s32.totalorder %s25, %s41
      %p43 = scmp.eq.s32.totalorder %s17, 0
      %p44 = por %p42, %p43
      %s46 = sadd.s32 %s45, 1
      %p49 = scmp.eq.s32.totalorder %s11, 1
      %p50 = scmp.ne.s32.totalorder %s45, %s47
      %p51 = scmp.eq.s32.totalorder %s11, 0
      %p52 = por %p50, %p51
      %p53 = scmp.ne.s32.totalorder %s45, %s47
      %p54 = scmp.eq.s32.totalorder %s16, 1
      %p55 = por %p53, %p54
      %p56 = scmp.ne.s32.totalorder %s47, %s48
      %p57 = scmp.eq.s32.totalorder %s16, 0
      %p58 = por %p56, %p57
      %p59 = scmp.ne.s32.totalorder %s47, %s48
      %p60 = scmp.eq.s32.totalorder %s17, 1
      %p61 = por %p59, %p60
      %p63 = scmp.ne.s32.totalorder %s48, %s62
      %p64 = scmp.eq.s32.totalorder %s17, 0
      %p65 = por %p63, %p64
      %s66 = ssub.s32 %s11, %s18
      %p67 = scmp.eq.s32.totalorder %s66, 0
      %s69 = sadd.s32 %s68, 1
      %s70 = scalar_select %p67, %s68, %s69
      %p73 = pneg %p67
      %p74 = scmp.eq.s32.totalorder %s11, 1
      %p75 = por %p73, %p74
      %p76 = scmp.ne.s32.totalorder %s68, %s71
      %p77 = scmp.eq.s32.totalorder %s11, 0
      %p78 = por %p76, %p77
      %p79 = scmp.ne.s32.totalorder %s68, %s71
      %p80 = scmp.eq.s32.totalorder %s16, 1
      %p81 = por %p79, %p80
      %p82 = scmp.ne.s32.totalorder %s71, %s72
      %p83 = scmp.eq.s32.totalorder %s16, 0
      %p84 = por %p82, %p83
      %p85 = scmp.ne.s32.totalorder %s71, %s72
      %p86 = scmp.eq.s32.totalorder %s17, 1
      %p87 = por %p85, %p86
      %p89 = scmp.ne.s32.totalorder %s72, %s88
      %p90 = scmp.eq.s32.totalorder %s17, 0
      %p91 = por %p89, %p90
      %s92 = ssub.s32 %s11, %s18
      %p93 = scmp.eq.s32.totalorder %s92, 0
      %s95 = sadd.s32 %s94, 1
      %s96 = scalar_select %p93, %s94, %s95
      %p99 = pneg %p93
      %p100 = scmp.eq.s32.totalorder %s11, 1
      %p101 = por %p99, %p100
      %p102 = scmp.ne.s32.totalorder %s94, %s97
      %p103 = scmp.eq.s32.totalorder %s11, 0
      %p104 = por %p102, %p103
      %p105 = scmp.ne.s32.totalorder %s94, %s97
      %p106 = scmp.eq.s32.totalorder %s16, 1
      %p107 = por %p105, %p106
      %p108 = scmp.ne.s32.totalorder %s97, %s98
      %p109 = scmp.eq.s32.totalorder %s16, 0
      %p110 = por %p108, %p109
      %p111 = scmp.ne.s32.totalorder %s97, %s98
      %p112 = scmp.eq.s32.totalorder %s17, 1
      %p113 = por %p111, %p112
      %p115 = scmp.ne.s32.totalorder %s98, %s114
      %p116 = scmp.eq.s32.totalorder %s17, 0
      %p117 = por %p115, %p116
      %p118 = scmp.le.s32.totalorder 1, %s11
      %p119 = scmp.lt.s32.totalorder %s11, 3
      %p120 = pnand %p118, %p119
      %p121 = pneg %p120
      // Predicated region
      $region9: #{cat_posenet.1} parent=5 // pred_check
        _
      $region10: #{cat_posenet.1} parent=5 // pred_check_branch
        %123 = sbr.rel (%p120) target = $region12
      $region11: #{cat_posenet.1} parent=5 // pred_region
        %s124 = ssub.s32 %s11, 1
        // Predicated region
        $region13: #{cat_posenet.1} parent=11 // pred_check
          %p125 = pneg %p58
        $region14: #{cat_posenet.1} parent=11 // pred_check_branch
          %127 = sbr.rel (%p125) target = $region16
        $region15: #{cat_posenet.1} parent=11 // pred_region
          %s129 = ssub.s32 18944, 18944
          %130 = vsyncadd [#allocation3], %s129
          %s131 = sshll.u32 [#allocation2], 4
          %s132 = int_to_ptr.vmem [resolvable:$true] %s131
          %137 = dma.hbm_to_vmem [thread:$0]  %s1, 18944, %s132, [#allocation3], 256, 256, 16
        $region16: #{cat_posenet.1} parent=11 // pred_fallthru
          _
      $region12: #{cat_posenet.1} parent=5 // pred_fallthru
        _
      %p138 = scmp.lt.s32.totalorder %s11, 2
      // Predicated region
      $region17: #{cat_posenet.1} parent=5 // pred_check
        %p139 = pneg %p138
      $region18: #{cat_posenet.1} parent=5 // pred_check_branch
        %141 = sbr.rel (%p139) target = $region20
      $region19: #{cat_posenet.1} parent=5 // pred_region
        // Predicated region
        $region21: #{cat_posenet.1} parent=19 // pred_check
          %p142 = pneg %p31
        $region22: #{cat_posenet.1} parent=19 // pred_check_branch
          %144 = sbr.rel (%p142) target = $region24
        $region23: #{cat_posenet.1} parent=19 // pred_region
          %p145 = scmp.lt.s32.totalorder %s11, 1
          %s146 = scalar_select %p145, %s11, 1
          %s147 = smul.addr %s146, 16
          %s148 = smul.addr %s147, 8
          %s149 = scalar_lea.vmem %s0, %s148
        $region24: #{cat_posenet.1} parent=19 // pred_fallthru
          _
      $region20: #{cat_posenet.1} parent=5 // pred_fallthru
        _
      %p150 = scmp.le.s32.totalorder 1, %s11
      %p151 = scmp.lt.s32.totalorder %s11, 3
      %p152 = pnand %p150, %p151
      %p153 = pneg %p152
      // Predicated region
      $region25: #{cat_posenet.1} parent=5 // pred_check
        _
      $region26: #{cat_posenet.1} parent=5 // pred_check_branch
        %155 = sbr.rel (%p152) target = $region28
      $region27: #{cat_posenet.1} parent=5 // pred_region
        %s156 = ssub.s32 %s11, 1
        // Predicated region
        $region29: #{cat_posenet.1} parent=27 // pred_check
          %p157 = pneg %p58
        $region30: #{cat_posenet.1} parent=27 // pred_check_branch
          %159 = sbr.rel (%p157) target = $region32
        $region31: #{cat_posenet.1} parent=27 // pred_region
          %160 = dma.done [#allocation3], 18944
        $region32: #{cat_posenet.1} parent=27 // pred_fallthru
          _
        %p161 = scmp.lt.s32.totalorder %s16, 1
        %s162 = scalar_select %p161, %s16, 1
        %s163 = smul.addr %s162, 16
        %s164 = smul.addr %s163, 8
        %s165 = scalar_lea.vmem %s0, %s164
        %p166 = pneg %p37
        %p167 = pneg %p34
        %p168 = pneg %p58
        %p169 = pneg %p55
        %p170 = pneg %p84
        %p171 = pneg %p81
        %p172 = scmp.lt.s32.totalorder %s16, 1
        %s173 = scalar_select %p172, %s16, 1
        %s174 = smul.addr %s173, 16
        %s175 = smul.addr %s174, 8
        %s176 = scalar_lea.vmem %s2, %s175
        %p177 = pneg %p110
        %p178 = pneg %p107
        %p179 = scmp.lt.s32.totalorder %s16, 1
        %s180 = scalar_select %p179, %s16, 1
        %s181 = smul.addr %s180, 8
        %s182 = scalar_lea.vmem %s3, %s181
        %p183 = scmp.lt.s32.totalorder %s16, 1
        %s184 = scalar_select %p183, %s16, 1
        %s185 = smul.addr %s184, 16
        %s186 = smul.addr %s185, 8
        %s187 = scalar_lea.vmem %s0, %s186
        %p188 = scmp.lt.s32.totalorder %s16, 1
        %s189 = scalar_select %p188, %s16, 1
        %s190 = smul.addr %s189, 16
        %s191 = smul.addr %s190, 8
        %s192 = scalar_lea.vmem %s2, %s191
        %p193 = scmp.lt.s32.totalorder %s16, 1
        %s194 = scalar_select %p193, %s16, 1
        %s195 = smul.addr %s194, 8
        %s196 = scalar_lea.vmem %s3, %s195
        %v197 = vld [vmem:[%s187] sm:$0xff]
        %v198 = vld [vmem:[%s187 + $0x8] sm:$0xff]
        %v199 = vld [vmem:[%s187 + $0x10] sm:$0xff]
        %v200 = vld [vmem:[%s187 + $0x18] sm:$0xff]
        %v201 = vld [vmem:[%s187 + $0x20] sm:$0xff]
        %v202 = vld [vmem:[%s187 + $0x28] sm:$0xff]
        %v203 = vld [vmem:[%s187 + $0x30] sm:$0xff]
        %v204 = vld [vmem:[%s187 + $0x38] sm:$0xff]
        %v205 = vld [vmem:[%s187 + $0x40] sm:$0xff]
        %v206 = vld [vmem:[%s187 + $0x48] sm:$0xff]
        %v207 = vld [vmem:[%s187 + $0x50] sm:$0xff]
        %v208 = vld [vmem:[%s187 + $0x58] sm:$0xff]
        %v209 = vld [vmem:[%s187 + $0x60] sm:$0xff]
        %v210 = vld [vmem:[%s187 + $0x68] sm:$0xff]
        %v211 = vld [vmem:[%s187 + $0x70] sm:$0xff]
        %v212 = vld [vmem:[%s187 + $0x78] sm:$0xff]
        %vm213 = vcmask 23552
        %v214 = vsel %vm213, %v197, 0.0
        %v215 = vsel %vm213, %v198, 0.0
        %v216 = vadd.f32 %v214, %v215
        %v217 = vsel %vm213, %v199, 0.0
        %v218 = vadd.f32 %v216, %v217
        %v219 = vsel %vm213, %v200, 0.0
        %v220 = vadd.f32 %v218, %v219
        %v221 = vsel %vm213, %v201, 0.0
        %v222 = vadd.f32 %v220, %v221
        %v223 = vsel %vm213, %v202, 0.0
        %v224 = vadd.f32 %v222, %v223
        %v225 = vsel %vm213, %v203, 0.0
        %v226 = vadd.f32 %v224, %v225
        %v227 = vsel %vm213, %v204, 0.0
        %v228 = vadd.f32 %v226, %v227
        %v229 = vsel %vm213, %v205, 0.0
        %v230 = vadd.f32 %v228, %v229
        %v231 = vsel %vm213, %v206, 0.0
        %v232 = vadd.f32 %v230, %v231
        %v233 = vsel %vm213, %v207, 0.0
        %v234 = vadd.f32 %v232, %v233
        %v235 = vsel %vm213, %v208, 0.0
        %v236 = vadd.f32 %v234, %v235
        %v237 = vsel %vm213, %v209, 0.0
        %v238 = vadd.f32 %v236, %v237
        %v239 = vsel %vm213, %v210, 0.0
        %v240 = vadd.f32 %v238, %v239
        %v241 = vsel %vm213, %v211, 0.0
        %v242 = vadd.f32 %v240, %v241
        %v243 = vsel %vm213, %v212, 0.0
        %v244 = vadd.f32 %v242, %v243
        %v245 = vrot.slane %v244, 4
        %v246 = vadd.f32 %v244, %v245
        %v247 = vrot.slane %v246, 2
        %v248 = vadd.f32 %v246, %v247
        %v249 = vrot.slane %v248, 1
        %v250 = vadd.f32 %v248, %v249
        %v251 = vrcp.pop 128.0
        %v252 = vmul.f32 %v250, %v251
        %v253 = vsub.f32 %v197, %v252
        %v254 = vsub.f32 %v198, %v252
        %v255 = vsub.f32 %v199, %v252
        %v256 = vsub.f32 %v200, %v252
        %v257 = vsub.f32 %v201, %v252
        %v258 = vsub.f32 %v202, %v252
        %v259 = vsub.f32 %v203, %v252
        %v260 = vsub.f32 %v204, %v252
        %v261 = vsub.f32 %v205, %v252
        %v262 = vsub.f32 %v206, %v252
        %v263 = vsub.f32 %v207, %v252
        %v264 = vsub.f32 %v208, %v252
        %v265 = vsub.f32 %v209, %v252
        %v266 = vsub.f32 %v210, %v252
        %v267 = vsub.f32 %v211, %v252
        %v268 = vsub.f32 %v212, %v252
        %v269 = vld [vmem:[#allocation2] sm:$0x7]
        %v270 = vld [vmem:[#allocation2 + $0x10] sm:$0xff]
        %v271 = vld [vmem:[#allocation2 + $0x20] sm:$0xff]
        %v272 = vld [vmem:[#allocation2 + $0x30] sm:$0xff]
        %v273 = vld [vmem:[#allocation2 + $0x40] sm:$0xff]
        %v274 = vld [vmem:[#allocation2 + $0x50] sm:$0xff]
        %v275 = vld [vmem:[#allocation2 + $0x60] sm:$0xff]
        %v276 = vld [vmem:[#allocation2 + $0x70] sm:$0xff]
        %v277 = vld [vmem:[#allocation2 + $0x80] sm:$0xff]
        %v278 = vld [vmem:[#allocation2 + $0x90] sm:$0xff]
        %v279 = vld [vmem:[#allocation2 + $0xa0] sm:$0xff]
        %v280 = vld [vmem:[#allocation2 + $0xb0] sm:$0xff]
        %v281 = vld [vmem:[#allocation2 + $0xc0] sm:$0xff]
        %v282 = vld [vmem:[#allocation2 + $0xd0] sm:$0xff]
        %v283 = vld [vmem:[#allocation2 + $0xe0] sm:$0xff]
        %v284 = vld [vmem:[#allocation2 + $0xf0] sm:$0xff]
        %v285 = vld [vmem:[#allocation2 + $0x100] sm:$0xff]
        %v286 = vld [vmem:[#allocation2 + $0x110] sm:$0xff]
        %v287 = vld [vmem:[#allocation2 + $0x118] sm:$0xff]
        %v288 = vld [vmem:[#allocation2 + $0x120] sm:$0xff]
        %v289 = vld [vmem:[#allocation2 + $0x128] sm:$0xff]
        %v290 = vld [vmem:[#allocation2 + $0x130] sm:$0xff]
        %v291 = vld [vmem:[#allocation2 + $0x138] sm:$0xff]
        %v292 = vld [vmem:[#allocation2 + $0x140] sm:$0xff]
        %v293 = vld [vmem:[#allocation2 + $0x148] sm:$0xff]
        %v294 = vld [vmem:[#allocation2 + $0x150] sm:$0xff]
        %v295 = vld [vmem:[#allocation2 + $0x158] sm:$0xff]
        %v296 = vld [vmem:[#allocation2 + $0x160] sm:$0xff]
        %v297 = vld [vmem:[#allocation2 + $0x168] sm:$0xff]
        %v298 = vld [vmem:[#allocation2 + $0x170] sm:$0xff]
        %v299 = vld [vmem:[#allocation2 + $0x178] sm:$0xff]
        %v300 = vld [vmem:[#allocation2 + $0x180] sm:$0xff]
        %v301 = vld [vmem:[#allocation2 + $0x188] sm:$0xff]
        %v302 = vld [vmem:[#allocation2 + $0x190] sm:$0xff]
        %v303 = vld [vmem:[#allocation2 + $0x1a0] sm:$0xff]
        %v304 = vld [vmem:[#allocation2 + $0x1b0] sm:$0xff]
        %v305 = vld [vmem:[#allocation2 + $0x1c0] sm:$0xff]
        %v306 = vld [vmem:[#allocation2 + $0x1d0] sm:$0xff]
        %v307 = vld [vmem:[#allocation2 + $0x1e0] sm:$0xff]
        %v308 = vld [vmem:[#allocation2 + $0x1f0] sm:$0xff]
        %v309 = vld [vmem:[#allocation2 + $0x200] sm:$0xff]
        %v310 = vld [vmem:[#allocation2 + $0x210] sm:$0xff]
        %v311 = vld [vmem:[#allocation2 + $0x220] sm:$0xff]
        %v312 = vld [vmem:[#allocation2 + $0x230] sm:$0xff]
        %v313 = vld [vmem:[#allocation2 + $0x240] sm:$0xff]
        %v314 = vld [vmem:[#allocation2 + $0x250] sm:$0xff]
        %v315 = vld [vmem:[#allocation2 + $0x260] sm:$0xff]
        %v316 = vld [vmem:[#allocation2 + $0x270] sm:$0xff]
        %v317 = vld [vmem:[#allocation2 + $0x280] sm:$0xff]
        %v318 = vld [vmem:[#allocation2 + $0x290] sm:$0xff]
        %v319 = vld [vmem:[#allocation2 + $0x2a0] sm:$0xff]
        %v320 = vld [vmem:[#allocation2 + $0x2b0] sm:$0xff]
        %v321 = vld [vmem:[#allocation2 + $0x2c0] sm:$0xff]
        %v322 = vld [vmem:[#allocation2 + $0x2d0] sm:$0xff]
        %v323 = vld [vmem:[#allocation2 + $0x2e0] sm:$0xff]
        %v324 = vld [vmem:[#allocation2 + $0x2f0] sm:$0xff]
        %v325 = vld [vmem:[#allocation2 + $0x300] sm:$0xff]
        %v326 = vld [vmem:[#allocation2 + $0x310] sm:$0xff]
        %v327 = vld [vmem:[#allocation2 + $0x320] sm:$0xff]
        %v328 = vld [vmem:[#allocation2 + $0x330] sm:$0xff]
        %v329 = vld [vmem:[#allocation2 + $0x340] sm:$0xff]
        %v330 = vld [vmem:[#allocation2 + $0x350] sm:$0xff]
        %v331 = vld [vmem:[#allocation2 + $0x360] sm:$0xff]
        %v332 = vld [vmem:[#allocation2 + $0x370] sm:$0xff]
        %v333 = vld [vmem:[#allocation2 + $0x380] sm:$0xff]
        %v334 = vld [vmem:[#allocation2 + $0x390] sm:$0xff]
        %v335 = vld [vmem:[#allocation2 + $0x3a0] sm:$0xff]
        %v336 = vld [vmem:[#allocation2 + $0x3b0] sm:$0xff]
        %v337 = vld [vmem:[#allocation2 + $0x3c0] sm:$0xff]
        %v338 = vld [vmem:[#allocation2 + $0x3d0] sm:$0xff]
        %v339 = vld [vmem:[#allocation2 + $0x3e0] sm:$0xff]
        %v340 = vld [vmem:[#allocation2 + $0x3f0] sm:$0xff]
        %v341 = vld [vmem:[#allocation2 + $0x400] sm:$0xff]
        %v342 = vld [vmem:[#allocation2 + $0x410] sm:$0xff]
        %v343 = vld [vmem:[#allocation2 + $0x420] sm:$0xff]
        %v344 = vld [vmem:[#allocation2 + $0x430] sm:$0xff]
        %v345 = vld [vmem:[#allocation2 + $0x440] sm:$0xff]
        %v346 = vld [vmem:[#allocation2 + $0x450] sm:$0xff]
        %v347 = vld [vmem:[#allocation2 + $0x460] sm:$0xff]
        %v348 = vld [vmem:[#allocation2 + $0x470] sm:$0xff]
        %v349 = vld [vmem:[#allocation2 + $0x480] sm:$0xff]
        %v350 = vld [vmem:[#allocation2 + $0x490] ss:$0 sm:$0xff]
        %v351 = vld [vmem:[#allocation2 + $0x491] ss:$0 sm:$0xff]
        %s352 = scalar_lea.vmem [#allocation2], 1170
        %v353 = vld [vmem:[%s352] ss:$8 sm:$0x3]
        %v354 = vld [vmem:[#allocation2 + $0x493] ss:$0 sm:$0xff]
        %v355 = vld [vmem:[#allocation2 + $0x494] ss:$0 sm:$0xff]
        %v356 = vld [vmem:[#allocation2 + $0x495] ss:$0 sm:$0xff]
        %v358 = vsel %vm213, %v253, 0
        %v361 = vsel %vm213, %v254, 0
        %v364 = vsel %vm213, %v255, 0
        %v367 = vsel %vm213, %v256, 0
        %v370 = vsel %vm213, %v257, 0
        %v373 = vsel %vm213, %v258, 0
        %v376 = vsel %vm213, %v259, 0
        %v379 = vsel %vm213, %v260, 0
        %v382 = vsel %vm213, %v261, 0
        %v385 = vsel %vm213, %v262, 0
        %v388 = vsel %vm213, %v263, 0
        %v391 = vsel %vm213, %v264, 0
        %v394 = vsel %vm213, %v265, 0
        %v397 = vsel %vm213, %v266, 0
        %v400 = vsel %vm213, %v267, 0
        %v403 = vsel %vm213, %v268, 0
        %vm405 = vcmask 1042432
        %v407 = vsel %vm405, %v269, 0
        %409 = vmatprep.subr.mxu0 0.0
        %410 = vmatpush1.msra.mxu0 0.0
        %411 = vmatprep.subr.mxu0 0.0
        %412 = vmatpush1.msra.mxu0 0.0
        %413 = vmatprep.subr.mxu0 0.0
        %414 = vmatpush1.msra.mxu0 0.0
        %415 = vmatprep.subr.mxu0 0.0
        %416 = vmatpush1.msra.mxu0 0.0
        %417 = vmatprep.subr.mxu0 0.0
        %418 = vmatpush1.msra.mxu0 0.0
        %419 = vmatprep.subr.mxu0 0.0
        %420 = vmatpush1.msra.mxu0 0.0
        %421 = vmatprep.subr.mxu0 0.0
        %422 = vmatpush1.msra.mxu0 0.0
        %423 = vmatprep.subr.mxu0 0.0
        %424 = vmatpush1.msra.mxu0 0.0
        %425 = vmatprep.subr.mxu0 0.0
        %426 = vmatpush1.msra.mxu0 0.0
        %427 = vmatprep.subr.mxu0 0.0
        %428 = vmatpush1.msra.mxu0 0.0
        %429 = vmatprep.subr.mxu0 0.0
        %430 = vmatpush1.msra.mxu0 0.0
        %431 = vmatprep.subr.mxu0 0.0
        %432 = vmatpush1.msra.mxu0 0.0
        %433 = vmatprep.subr.mxu0 0.0
        %434 = vmatpush1.msra.mxu0 0.0
        %435 = vmatprep.subr.mxu0 0.0
        %436 = vmatpush1.msra.mxu0 0.0
        %437 = vmatprep.subr.mxu0 0.0
        %438 = vmatpush1.msra.mxu0 0.0
        %439 = vmatprep.subr.mxu0 0.0
        %440 = vmatpush1.msra.mxu0 %v407
        %441 = vmatprep.subr.mxu0 0.0
        %442 = vmatpush2.msra.mxu0 0.0
        %443 = vmatprep.subr.mxu0 0.0
        %444 = vmatpush2.msra.mxu0 0.0
        %445 = vmatprep.subr.mxu0 0.0
        %446 = vmatpush2.msra.mxu0 0.0
        %447 = vmatprep.subr.mxu0 0.0
        %448 = vmatpush2.msra.mxu0 0.0
        %449 = vmatprep.subr.mxu0 0.0
        %450 = vmatpush2.msra.mxu0 0.0
        %451 = vmatprep.subr.mxu0 0.0
        %452 = vmatpush2.msra.mxu0 0.0
        %453 = vmatprep.subr.mxu0 0.0
        %454 = vmatpush2.msra.mxu0 0.0
        %455 = vmatprep.subr.mxu0 0.0
        %456 = vmatpush2.msra.mxu0 0.0
        %457 = vmatprep.subr.mxu0 0.0
        %458 = vmatpush2.msra.mxu0 0.0
        %459 = vmatprep.subr.mxu0 0.0
        %460 = vmatpush2.msra.mxu0 0.0
        %461 = vmatprep.subr.mxu0 0.0
        %462 = vmatpush2.msra.mxu0 0.0
        %463 = vmatprep.subr.mxu0 0.0
        %464 = vmatpush2.msra.mxu0 0.0
        %465 = vmatprep.subr.mxu0 0.0
        %466 = vmatpush2.msra.mxu0 0.0
        %467 = vmatprep.subr.mxu0 0.0
        %468 = vmatpush2.msra.mxu0 0.0
        %469 = vmatprep.subr.mxu0 0.0
        %470 = vmatpush2.msra.mxu0 0.0
        %471 = vmatprep.subr.mxu0 0.0
        %472 = vmatpush2.msra.mxu0 0.0
        %473 = vmatprep.mubr.f32.mxu0 0.0
        %474 = vmatmul.mubr.f32.gmra.mxu0 %v358
        %v475 = vpop.f32.mrf.mxu0
        %v476 = vadd.f32 %v350, %v475
        %v477 = vpop.f32.mrf.mxu0
        %478 = vmatprep.mubr.f32.mxu0 0.0
        %479 = vmatmul.mubr.f32.gmra.mxu0 %v361
        %v480 = vpop.f32.mrf.mxu0
        %v481 = vadd.f32 %v350, %v480
        %v482 = vpop.f32.mrf.mxu0
        %483 = vmatprep.mubr.f32.mxu0 0.0
        %484 = vmatmul.mubr.f32.gmra.mxu0 %v364
        %v485 = vpop.f32.mrf.mxu0
        %v486 = vadd.f32 %v350, %v485
        %v487 = vpop.f32.mrf.mxu0
        %488 = vmatprep.mubr.f32.mxu0 0.0
        %489 = vmatmul.mubr.f32.gmra.mxu0 %v367
        %v490 = vpop.f32.mrf.mxu0
        %v491 = vadd.f32 %v350, %v490
        %v492 = vpop.f32.mrf.mxu0
        %493 = vmatprep.mubr.f32.mxu0 0.0
        %494 = vmatmul.mubr.f32.gmra.mxu0 %v370
        %v495 = vpop.f32.mrf.mxu0
        %v496 = vadd.f32 %v350, %v495
        %v497 = vpop.f32.mrf.mxu0
        %498 = vmatprep.mubr.f32.mxu0 0.0
        %499 = vmatmul.mubr.f32.gmra.mxu0 %v373
        %v500 = vpop.f32.mrf.mxu0
        %v501 = vadd.f32 %v350, %v500
        %v502 = vpop.f32.mrf.mxu0
        %503 = vmatprep.mubr.f32.mxu0 0.0
        %504 = vmatmul.mubr.f32.gmra.mxu0 %v376
        %v505 = vpop.f32.mrf.mxu0
        %v506 = vadd.f32 %v350, %v505
        %v507 = vpop.f32.mrf.mxu0
        %508 = vmatprep.mubr.f32.mxu0 0.0
        %509 = vmatmul.mubr.f32.gmra.mxu0 %v379
        %v510 = vpop.f32.mrf.mxu0
        %v511 = vadd.f32 %v350, %v510
        %v512 = vpop.f32.mrf.mxu0
        %513 = vmatprep.mubr.f32.mxu0 0.0
        %514 = vmatmul.mubr.f32.gmra.mxu0 %v382
        %v515 = vpop.f32.mrf.mxu0
        %v516 = vadd.f32 %v350, %v515
        %v517 = vpop.f32.mrf.mxu0
        %518 = vmatprep.mubr.f32.mxu0 0.0
        %519 = vmatmul.mubr.f32.gmra.mxu0 %v385
        %v520 = vpop.f32.mrf.mxu0
        %v521 = vadd.f32 %v350, %v520
        %v522 = vpop.f32.mrf.mxu0
        %523 = vmatprep.mubr.f32.mxu0 0.0
        %524 = vmatmul.mubr.f32.gmra.mxu0 %v388
        %v525 = vpop.f32.mrf.mxu0
        %v526 = vadd.f32 %v350, %v525
        %v527 = vpop.f32.mrf.mxu0
        %528 = vmatprep.mubr.f32.mxu0 0.0
        %529 = vmatmul.mubr.f32.gmra.mxu0 %v391
        %v530 = vpop.f32.mrf.mxu0
        %v531 = vadd.f32 %v350, %v530
        %v532 = vpop.f32.mrf.mxu0
        %533 = vmatprep.mubr.f32.mxu0 0.0
        %534 = vmatmul.mubr.f32.gmra.mxu0 %v394
        %v535 = vpop.f32.mrf.mxu0
        %v536 = vadd.f32 %v350, %v535
        %v537 = vpop.f32.mrf.mxu0
        %538 = vmatprep.mubr.f32.mxu0 0.0
        %539 = vmatmul.mubr.f32.gmra.mxu0 %v397
        %v540 = vpop.f32.mrf.mxu0
        %v541 = vadd.f32 %v350, %v540
        %v542 = vpop.f32.mrf.mxu0
        %543 = vmatprep.mubr.f32.mxu0 0.0
        %544 = vmatmul.mubr.f32.gmra.mxu0 %v400
        %v545 = vpop.f32.mrf.mxu0
        %v546 = vadd.f32 %v350, %v545
        %v547 = vpop.f32.mrf.mxu0
        %548 = vmatprep.mubr.f32.mxu0 0.0
        %549 = vmatmul.mubr.f32.gmra.mxu0 %v403
        %v550 = vpop.f32.mrf.mxu0
        %v551 = vadd.f32 %v350, %v550
        %v552 = vpop.f32.mrf.mxu0
        %553 = vdwg.mxu0
        %v554 = vmax.f32 %v476, 0.0
        %v555 = vmax.f32 %v481, 0.0
        %v556 = vmax.f32 %v486, 0.0
        %v557 = vmax.f32 %v491, 0.0
        %v558 = vmax.f32 %v496, 0.0
        %v559 = vmax.f32 %v501, 0.0
        %v560 = vmax.f32 %v506, 0.0
        %v561 = vmax.f32 %v511, 0.0
        %v562 = vmax.f32 %v516, 0.0
        %v563 = vmax.f32 %v521, 0.0
        %v564 = vmax.f32 %v526, 0.0
        %v565 = vmax.f32 %v531, 0.0
        %v566 = vmax.f32 %v536, 0.0
        %v567 = vmax.f32 %v541, 0.0
        %v568 = vmax.f32 %v546, 0.0
        %v569 = vmax.f32 %v551, 0.0
        %570 = vmatprep.subr.mxu0 0.0
        %571 = vmatpush1.msra.mxu0 %v285
        %572 = vmatprep.subr.mxu0 0.0
        %573 = vmatpush1.msra.mxu0 %v284
        %574 = vmatprep.subr.mxu0 0.0
        %575 = vmatpush1.msra.mxu0 %v283
        %576 = vmatprep.subr.mxu0 0.0
        %577 = vmatpush1.msra.mxu0 %v282
        %578 = vmatprep.subr.mxu0 0.0
        %579 = vmatpush1.msra.mxu0 %v281
        %580 = vmatprep.subr.mxu0 0.0
        %581 = vmatpush1.msra.mxu0 %v280
        %582 = vmatprep.subr.mxu0 0.0
        %583 = vmatpush1.msra.mxu0 %v279
        %584 = vmatprep.subr.mxu0 0.0
        %585 = vmatpush1.msra.mxu0 %v278
        %586 = vmatprep.subr.mxu0 0.0
        %587 = vmatpush1.msra.mxu0 %v277
        %588 = vmatprep.subr.mxu0 0.0
        %589 = vmatpush1.msra.mxu0 %v276
        %590 = vmatprep.subr.mxu0 0.0
        %591 = vmatpush1.msra.mxu0 %v275
        %592 = vmatprep.subr.mxu0 0.0
        %593 = vmatpush1.msra.mxu0 %v274
        %594 = vmatprep.subr.mxu0 0.0
        %595 = vmatpush1.msra.mxu0 %v273
        %596 = vmatprep.subr.mxu0 0.0
        %597 = vmatpush1.msra.mxu0 %v272
        %598 = vmatprep.subr.mxu0 0.0
        %599 = vmatpush1.msra.mxu0 %v271
        %600 = vmatprep.subr.mxu0 0.0
        %601 = vmatpush1.msra.mxu0 %v270
        %602 = vmatprep.subr.mxu0 0.0
        %603 = vmatpush2.msra.mxu0 0.0
        %604 = vmatprep.subr.mxu0 0.0
        %605 = vmatpush2.msra.mxu0 0.0
        %606 = vmatprep.subr.mxu0 0.0
        %607 = vmatpush2.msra.mxu0 0.0
        %608 = vmatprep.subr.mxu0 0.0
        %609 = vmatpush2.msra.mxu0 0.0
        %610 = vmatprep.subr.mxu0 0.0
        %611 = vmatpush2.msra.mxu0 0.0
        %612 = vmatprep.subr.mxu0 0.0
        %613 = vmatpush2.msra.mxu0 0.0
        %614 = vmatprep.subr.mxu0 0.0
        %615 = vmatpush2.msra.mxu0 0.0
        %616 = vmatprep.subr.mxu0 0.0
        %617 = vmatpush2.msra.mxu0 0.0
        %618 = vmatprep.subr.mxu0 0.0
        %619 = vmatpush2.msra.mxu0 0.0
        %620 = vmatprep.subr.mxu0 0.0
        %621 = vmatpush2.msra.mxu0 0.0
        %622 = vmatprep.subr.mxu0 0.0
        %623 = vmatpush2.msra.mxu0 0.0
        %624 = vmatprep.subr.mxu0 0.0
        %625 = vmatpush2.msra.mxu0 0.0
        %626 = vmatprep.subr.mxu0 0.0
        %627 = vmatpush2.msra.mxu0 0.0
        %628 = vmatprep.subr.mxu0 0.0
        %629 = vmatpush2.msra.mxu0 0.0
        %630 = vmatprep.subr.mxu0 0.0
        %631 = vmatpush2.msra.mxu0 0.0
        %632 = vmatprep.subr.mxu0 0.0
        %633 = vmatpush2.msra.mxu0 0.0
        %634 = vmatprep.mubr.f32.mxu0 0.0
        %635 = vmatmul.mubr.f32.gmra.mxu0 %v554
        %v636 = vpop.f32.mrf.mxu0
        %v637 = vadd.f32 %v351, %v636
        %v638 = vpop.f32.mrf.mxu0
        %639 = vmatprep.mubr.f32.mxu0 0.0
        %640 = vmatmul.mubr.f32.gmra.mxu0 %v555
        %v641 = vpop.f32.mrf.mxu0
        %v642 = vadd.f32 %v351, %v641
        %v643 = vpop.f32.mrf.mxu0
        %644 = vmatprep.mubr.f32.mxu0 0.0
        %645 = vmatmul.mubr.f32.gmra.mxu0 %v556
        %v646 = vpop.f32.mrf.mxu0
        %v647 = vadd.f32 %v351, %v646
        %v648 = vpop.f32.mrf.mxu0
        %649 = vmatprep.mubr.f32.mxu0 0.0
        %650 = vmatmul.mubr.f32.gmra.mxu0 %v557
        %v651 = vpop.f32.mrf.mxu0
        %v652 = vadd.f32 %v351, %v651
        %v653 = vpop.f32.mrf.mxu0
        %654 = vmatprep.mubr.f32.mxu0 0.0
        %655 = vmatmul.mubr.f32.gmra.mxu0 %v558
        %v656 = vpop.f32.mrf.mxu0
        %v657 = vadd.f32 %v351, %v656
        %v658 = vpop.f32.mrf.mxu0
        %659 = vmatprep.mubr.f32.mxu0 0.0
        %660 = vmatmul.mubr.f32.gmra.mxu0 %v559
        %v661 = vpop.f32.mrf.mxu0
        %v662 = vadd.f32 %v351, %v661
        %v663 = vpop.f32.mrf.mxu0
        %664 = vmatprep.mubr.f32.mxu0 0.0
        %665 = vmatmul.mubr.f32.gmra.mxu0 %v560
        %v666 = vpop.f32.mrf.mxu0
        %v667 = vadd.f32 %v351, %v666
        %v668 = vpop.f32.mrf.mxu0
        %669 = vmatprep.mubr.f32.mxu0 0.0
        %670 = vmatmul.mubr.f32.gmra.mxu0 %v561
        %v671 = vpop.f32.mrf.mxu0
        %v672 = vadd.f32 %v351, %v671
        %v673 = vpop.f32.mrf.mxu0
        %674 = vmatprep.mubr.f32.mxu0 0.0
        %675 = vmatmul.mubr.f32.gmra.mxu0 %v562
        %v676 = vpop.f32.mrf.mxu0
        %v677 = vadd.f32 %v351, %v676
        %v678 = vpop.f32.mrf.mxu0
        %679 = vmatprep.mubr.f32.mxu0 0.0
        %680 = vmatmul.mubr.f32.gmra.mxu0 %v563
        %v681 = vpop.f32.mrf.mxu0
        %v682 = vadd.f32 %v351, %v681
        %v683 = vpop.f32.mrf.mxu0
        %684 = vmatprep.mubr.f32.mxu0 0.0
        %685 = vmatmul.mubr.f32.gmra.mxu0 %v564
        %v686 = vpop.f32.mrf.mxu0
        %v687 = vadd.f32 %v351, %v686
        %v688 = vpop.f32.mrf.mxu0
        %689 = vmatprep.mubr.f32.mxu0 0.0
        %690 = vmatmul.mubr.f32.gmra.mxu0 %v565
        %v691 = vpop.f32.mrf.mxu0
        %v692 = vadd.f32 %v351, %v691
        %v693 = vpop.f32.mrf.mxu0
        %694 = vmatprep.mubr.f32.mxu0 0.0
        %695 = vmatmul.mubr.f32.gmra.mxu0 %v566
        %v696 = vpop.f32.mrf.mxu0
        %v697 = vadd.f32 %v351, %v696
        %v698 = vpop.f32.mrf.mxu0
        %699 = vmatprep.mubr.f32.mxu0 0.0
        %700 = vmatmul.mubr.f32.gmra.mxu0 %v567
        %v701 = vpop.f32.mrf.mxu0
        %v702 = vadd.f32 %v351, %v701
        %v703 = vpop.f32.mrf.mxu0
        %704 = vmatprep.mubr.f32.mxu0 0.0
        %705 = vmatmul.mubr.f32.gmra.mxu0 %v568
        %v706 = vpop.f32.mrf.mxu0
        %v707 = vadd.f32 %v351, %v706
        %v708 = vpop.f32.mrf.mxu0
        %709 = vmatprep.mubr.f32.mxu0 0.0
        %710 = vmatmul.mubr.f32.gmra.mxu0 %v569
        %v711 = vpop.f32.mrf.mxu0
        %v712 = vadd.f32 %v351, %v711
        %v713 = vpop.f32.mrf.mxu0
        %714 = vdwg.mxu0
        %v715 = vmax.f32 %v637, 0.0
        %v716 = vmax.f32 %v642, 0.0
        %v717 = vmax.f32 %v647, 0.0
        %v718 = vmax.f32 %v652, 0.0
        %v719 = vmax.f32 %v657, 0.0
        %v720 = vmax.f32 %v662, 0.0
        %v721 = vmax.f32 %v667, 0.0
        %v722 = vmax.f32 %v672, 0.0
        %v723 = vmax.f32 %v677, 0.0
        %v724 = vmax.f32 %v682, 0.0
        %v725 = vmax.f32 %v687, 0.0
        %v726 = vmax.f32 %v692, 0.0
        %v727 = vmax.f32 %v697, 0.0
        %v728 = vmax.f32 %v702, 0.0
        %v729 = vmax.f32 %v707, 0.0
        %v730 = vmax.f32 %v712, 0.0
        %v732 = vlaneseq
        %v733 = vshrl.u32 %v732, 7
        %v734 = vsub.s32 0, %v733
        %v735 = vrot.slane %v353, %v734
        %v736 = vlaneseq
        %v737 = vshrl.u32 %v736, 7
        %v738 = vsub.s32 1, %v737
        %v739 = vrot.slane %v353, %v738
        %vm742 = vcmask 523264
        %v744 = vsel %vm742, %v715, 0
        %v747 = vsel %vm742, %v716, 0
        %v750 = vsel %vm742, %v717, 0
        %v753 = vsel %vm742, %v718, 0
        %v756 = vsel %vm742, %v719, 0
        %v759 = vsel %vm742, %v720, 0
        %v762 = vsel %vm742, %v721, 0
        %v765 = vsel %vm742, %v722, 0
        %v768 = vsel %vm742, %v723, 0
        %v771 = vsel %vm742, %v724, 0
        %v774 = vsel %vm742, %v725, 0
        %v777 = vsel %vm742, %v726, 0
        %v780 = vsel %vm742, %v727, 0
        %v783 = vsel %vm742, %v728, 0
        %v786 = vsel %vm742, %v729, 0
        %v789 = vsel %vm742, %v730, 0
        %791 = vmatprep.subr.mxu0 0.0
        %792 = vmatpush1.msra.mxu0 0.0
        %793 = vmatprep.subr.mxu0 0.0
        %794 = vmatpush1.msra.mxu0 0.0
        %795 = vmatprep.subr.mxu0 0.0
        %796 = vmatpush1.msra.mxu0 0.0
        %797 = vmatprep.subr.mxu0 0.0
        %798 = vmatpush1.msra.mxu0 0.0
        %799 = vmatprep.subr.mxu0 0.0
        %800 = vmatpush1.msra.mxu0 0.0
        %801 = vmatprep.subr.mxu0 0.0
        %802 = vmatpush1.msra.mxu0 0.0
        %803 = vmatprep.subr.mxu0 0.0
        %804 = vmatpush1.msra.mxu0 0.0
        %805 = vmatprep.subr.mxu0 0.0
        %806 = vmatpush1.msra.mxu0 0.0
        %807 = vmatprep.subr.mxu0 %v301
        %808 = vmatpush1.msra.mxu0 %v300
        %809 = vmatprep.subr.mxu0 %v299
        %810 = vmatpush1.msra.mxu0 %v298
        %811 = vmatprep.subr.mxu0 %v297
        %812 = vmatpush1.msra.mxu0 %v296
        %813 = vmatprep.subr.mxu0 %v295
        %814 = vmatpush1.msra.mxu0 %v294
        %815 = vmatprep.subr.mxu0 %v293
        %816 = vmatpush1.msra.mxu0 %v292
        %817 = vmatprep.subr.mxu0 %v291
        %818 = vmatpush1.msra.mxu0 %v290
        %819 = vmatprep.subr.mxu0 %v289
        %820 = vmatpush1.msra.mxu0 %v288
        %821 = vmatprep.subr.mxu0 %v287
        %822 = vmatpush1.msra.mxu0 %v286
        %823 = vmatprep.subr.mxu0 0.0
        %824 = vmatpush2.msra.mxu0 0.0
        %825 = vmatprep.subr.mxu0 0.0
        %826 = vmatpush2.msra.mxu0 0.0
        %827 = vmatprep.subr.mxu0 0.0
        %828 = vmatpush2.msra.mxu0 0.0
        %829 = vmatprep.subr.mxu0 0.0
        %830 = vmatpush2.msra.mxu0 0.0
        %831 = vmatprep.subr.mxu0 0.0
        %832 = vmatpush2.msra.mxu0 0.0
        %833 = vmatprep.subr.mxu0 0.0
        %834 = vmatpush2.msra.mxu0 0.0
        %835 = vmatprep.subr.mxu0 0.0
        %836 = vmatpush2.msra.mxu0 0.0
        %837 = vmatprep.subr.mxu0 0.0
        %838 = vmatpush2.msra.mxu0 0.0
        %839 = vmatprep.subr.mxu0 0.0
        %840 = vmatpush2.msra.mxu0 0.0
        %841 = vmatprep.subr.mxu0 0.0
        %842 = vmatpush2.msra.mxu0 0.0
        %843 = vmatprep.subr.mxu0 0.0
        %844 = vmatpush2.msra.mxu0 0.0
        %845 = vmatprep.subr.mxu0 0.0
        %846 = vmatpush2.msra.mxu0 0.0
        %847 = vmatprep.subr.mxu0 0.0
        %848 = vmatpush2.msra.mxu0 0.0
        %849 = vmatprep.subr.mxu0 0.0
        %850 = vmatpush2.msra.mxu0 0.0
        %851 = vmatprep.subr.mxu0 0.0
        %852 = vmatpush2.msra.mxu0 0.0
        %853 = vmatprep.subr.mxu0 0.0
        %854 = vmatpush2.msra.mxu0 0.0
        %855 = vmatprep.mubr.f32.mxu0 0.0
        %856 = vmatmul.mubr.f32.gmra.mxu0 %v744
        %v857 = vpop.f32.mrf.mxu0
        %v858 = vadd.f32 %v735, %v857
        %v859 = vpop.f32.mrf.mxu0
        %v860 = vadd.f32 %v739, %v859
        %861 = vmatprep.mubr.f32.mxu0 0.0
        %862 = vmatmul.mubr.f32.gmra.mxu0 %v747
        %v863 = vpop.f32.mrf.mxu0
        %v864 = vadd.f32 %v735, %v863
        %v865 = vpop.f32.mrf.mxu0
        %v866 = vadd.f32 %v739, %v865
        %867 = vmatprep.mubr.f32.mxu0 0.0
        %868 = vmatmul.mubr.f32.gmra.mxu0 %v750
        %v869 = vpop.f32.mrf.mxu0
        %v870 = vadd.f32 %v735, %v869
        %v871 = vpop.f32.mrf.mxu0
        %v872 = vadd.f32 %v739, %v871
        %873 = vmatprep.mubr.f32.mxu0 0.0
        %874 = vmatmul.mubr.f32.gmra.mxu0 %v753
        %v875 = vpop.f32.mrf.mxu0
        %v876 = vadd.f32 %v735, %v875
        %v877 = vpop.f32.mrf.mxu0
        %v878 = vadd.f32 %v739, %v877
        %879 = vmatprep.mubr.f32.mxu0 0.0
        %880 = vmatmul.mubr.f32.gmra.mxu0 %v756
        %v881 = vpop.f32.mrf.mxu0
        %v882 = vadd.f32 %v735, %v881
        %v883 = vpop.f32.mrf.mxu0
        %v884 = vadd.f32 %v739, %v883
        %885 = vmatprep.mubr.f32.mxu0 0.0
        %886 = vmatmul.mubr.f32.gmra.mxu0 %v759
        %v887 = vpop.f32.mrf.mxu0
        %v888 = vadd.f32 %v735, %v887
        %v889 = vpop.f32.mrf.mxu0
        %v890 = vadd.f32 %v739, %v889
        %891 = vmatprep.mubr.f32.mxu0 0.0
        %892 = vmatmul.mubr.f32.gmra.mxu0 %v762
        %v893 = vpop.f32.mrf.mxu0
        %v894 = vadd.f32 %v735, %v893
        %v895 = vpop.f32.mrf.mxu0
        %v896 = vadd.f32 %v739, %v895
        %897 = vmatprep.mubr.f32.mxu0 0.0
        %898 = vmatmul.mubr.f32.gmra.mxu0 %v765
        %v899 = vpop.f32.mrf.mxu0
        %v900 = vadd.f32 %v735, %v899
        %v901 = vpop.f32.mrf.mxu0
        %v902 = vadd.f32 %v739, %v901
        %903 = vmatprep.mubr.f32.mxu0 0.0
        %904 = vmatmul.mubr.f32.gmra.mxu0 %v768
        %v905 = vpop.f32.mrf.mxu0
        %v906 = vadd.f32 %v735, %v905
        %v907 = vpop.f32.mrf.mxu0
        %v908 = vadd.f32 %v739, %v907
        %909 = vmatprep.mubr.f32.mxu0 0.0
        %910 = vmatmul.mubr.f32.gmra.mxu0 %v771
        %v911 = vpop.f32.mrf.mxu0
        %v912 = vadd.f32 %v735, %v911
        %v913 = vpop.f32.mrf.mxu0
        %v914 = vadd.f32 %v739, %v913
        %915 = vmatprep.mubr.f32.mxu0 0.0
        %916 = vmatmul.mubr.f32.gmra.mxu0 %v774
        %v917 = vpop.f32.mrf.mxu0
        %v918 = vadd.f32 %v735, %v917
        %v919 = vpop.f32.mrf.mxu0
        %v920 = vadd.f32 %v739, %v919
        %921 = vmatprep.mubr.f32.mxu0 0.0
        %922 = vmatmul.mubr.f32.gmra.mxu0 %v777
        %v923 = vpop.f32.mrf.mxu0
        %v924 = vadd.f32 %v735, %v923
        %v925 = vpop.f32.mrf.mxu0
        %v926 = vadd.f32 %v739, %v925
        %927 = vmatprep.mubr.f32.mxu0 0.0
        %928 = vmatmul.mubr.f32.gmra.mxu0 %v780
        %v929 = vpop.f32.mrf.mxu0
        %v930 = vadd.f32 %v735, %v929
        %v931 = vpop.f32.mrf.mxu0
        %v932 = vadd.f32 %v739, %v931
        %933 = vmatprep.mubr.f32.mxu0 0.0
        %934 = vmatmul.mubr.f32.gmra.mxu0 %v783
        %v935 = vpop.f32.mrf.mxu0
        %v936 = vadd.f32 %v735, %v935
        %v937 = vpop.f32.mrf.mxu0
        %v938 = vadd.f32 %v739, %v937
        %939 = vmatprep.mubr.f32.mxu0 0.0
        %940 = vmatmul.mubr.f32.gmra.mxu0 %v786
        %v941 = vpop.f32.mrf.mxu0
        %v942 = vadd.f32 %v735, %v941
        %v943 = vpop.f32.mrf.mxu0
        %v944 = vadd.f32 %v739, %v943
        %945 = vmatprep.mubr.f32.mxu0 0.0
        %946 = vmatmul.mubr.f32.gmra.mxu0 %v789
        %v947 = vpop.f32.mrf.mxu0
        %v948 = vadd.f32 %v735, %v947
        %v949 = vpop.f32.mrf.mxu0
        %v950 = vadd.f32 %v739, %v949
        %951 = vdwg.mxu0
        %v952 = vmax.f32 %v860, 0.0
        %v953 = vmax.f32 %v866, 0.0
        %v954 = vmax.f32 %v872, 0.0
        %v955 = vmax.f32 %v878, 0.0
        %v956 = vmax.f32 %v884, 0.0
        %v957 = vmax.f32 %v890, 0.0
        %v958 = vmax.f32 %v896, 0.0
        %v959 = vmax.f32 %v902, 0.0
        %v960 = vmax.f32 %v908, 0.0
        %v961 = vmax.f32 %v914, 0.0
        %v962 = vmax.f32 %v920, 0.0
        %v963 = vmax.f32 %v926, 0.0
        %v964 = vmax.f32 %v932, 0.0
        %v965 = vmax.f32 %v938, 0.0
        %v966 = vmax.f32 %v944, 0.0
        %v967 = vmax.f32 %v950, 0.0
        %968 = vmatprep.subr.mxu0 0.0
        %969 = vmatpush1.msra.mxu0 %v317
        %970 = vmatprep.subr.mxu0 0.0
        %971 = vmatpush1.msra.mxu0 %v316
        %972 = vmatprep.subr.mxu0 0.0
        %973 = vmatpush1.msra.mxu0 %v315
        %974 = vmatprep.subr.mxu0 0.0
        %975 = vmatpush1.msra.mxu0 %v314
        %976 = vmatprep.subr.mxu0 0.0
        %977 = vmatpush1.msra.mxu0 %v313
        %978 = vmatprep.subr.mxu0 0.0
        %979 = vmatpush1.msra.mxu0 %v312
        %980 = vmatprep.subr.mxu0 0.0
        %981 = vmatpush1.msra.mxu0 %v311
        %982 = vmatprep.subr.mxu0 0.0
        %983 = vmatpush1.msra.mxu0 %v310
        %984 = vmatprep.subr.mxu0 0.0
        %985 = vmatpush1.msra.mxu0 %v309
        %986 = vmatprep.subr.mxu0 0.0
        %987 = vmatpush1.msra.mxu0 %v308
        %988 = vmatprep.subr.mxu0 0.0
        %989 = vmatpush1.msra.mxu0 %v307
        %990 = vmatprep.subr.mxu0 0.0
        %991 = vmatpush1.msra.mxu0 %v306
        %992 = vmatprep.subr.mxu0 0.0
        %993 = vmatpush1.msra.mxu0 %v305
        %994 = vmatprep.subr.mxu0 0.0
        %995 = vmatpush1.msra.mxu0 %v304
        %996 = vmatprep.subr.mxu0 0.0
        %997 = vmatpush1.msra.mxu0 %v303
        %998 = vmatprep.subr.mxu0 0.0
        %999 = vmatpush1.msra.mxu0 %v302
        %1000 = vmatprep.subr.mxu0 0.0
        %1001 = vmatpush2.msra.mxu0 0.0
        %1002 = vmatprep.subr.mxu0 0.0
        %1003 = vmatpush2.msra.mxu0 0.0
        %1004 = vmatprep.subr.mxu0 0.0
        %1005 = vmatpush2.msra.mxu0 0.0
        %1006 = vmatprep.subr.mxu0 0.0
        %1007 = vmatpush2.msra.mxu0 0.0
        %1008 = vmatprep.subr.mxu0 0.0
        %1009 = vmatpush2.msra.mxu0 0.0
        %1010 = vmatprep.subr.mxu0 0.0
        %1011 = vmatpush2.msra.mxu0 0.0
        %1012 = vmatprep.subr.mxu0 0.0
        %1013 = vmatpush2.msra.mxu0 0.0
        %1014 = vmatprep.subr.mxu0 0.0
        %1015 = vmatpush2.msra.mxu0 0.0
        %1016 = vmatprep.subr.mxu0 0.0
        %1017 = vmatpush2.msra.mxu0 0.0
        %1018 = vmatprep.subr.mxu0 0.0
        %1019 = vmatpush2.msra.mxu0 0.0
        %1020 = vmatprep.subr.mxu0 0.0
        %1021 = vmatpush2.msra.mxu0 0.0
        %1022 = vmatprep.subr.mxu0 0.0
        %1023 = vmatpush2.msra.mxu0 0.0
        %1024 = vmatprep.subr.mxu0 0.0
        %1025 = vmatpush2.msra.mxu0 0.0
        %1026 = vmatprep.subr.mxu0 0.0
        %1027 = vmatpush2.msra.mxu0 0.0
        %1028 = vmatprep.subr.mxu0 0.0
        %1029 = vmatpush2.msra.mxu0 0.0
        %1030 = vmatprep.subr.mxu0 0.0
        %1031 = vmatpush2.msra.mxu0 0.0
        %1032 = vmatprep.mubr.f32.mxu0 0.0
        %1033 = vmatmul.mubr.f32.gmra.mxu0 %v952
        %v1034 = vpop.f32.mrf.mxu0
        %v1035 = vadd.f32 %v354, %v1034
        %v1036 = vpop.f32.mrf.mxu0
        %1037 = vmatprep.mubr.f32.mxu0 0.0
        %1038 = vmatmul.mubr.f32.gmra.mxu0 %v953
        %v1039 = vpop.f32.mrf.mxu0
        %v1040 = vadd.f32 %v354, %v1039
        %v1041 = vpop.f32.mrf.mxu0
        %1042 = vmatprep.mubr.f32.mxu0 0.0
        %1043 = vmatmul.mubr.f32.gmra.mxu0 %v954
        %v1044 = vpop.f32.mrf.mxu0
        %v1045 = vadd.f32 %v354, %v1044
        %v1046 = vpop.f32.mrf.mxu0
        %1047 = vmatprep.mubr.f32.mxu0 0.0
        %1048 = vmatmul.mubr.f32.gmra.mxu0 %v955
        %v1049 = vpop.f32.mrf.mxu0
        %v1050 = vadd.f32 %v354, %v1049
        %v1051 = vpop.f32.mrf.mxu0
        %1052 = vmatprep.mubr.f32.mxu0 0.0
        %1053 = vmatmul.mubr.f32.gmra.mxu0 %v956
        %v1054 = vpop.f32.mrf.mxu0
        %v1055 = vadd.f32 %v354, %v1054
        %v1056 = vpop.f32.mrf.mxu0
        %1057 = vmatprep.mubr.f32.mxu0 0.0
        %1058 = vmatmul.mubr.f32.gmra.mxu0 %v957
        %v1059 = vpop.f32.mrf.mxu0
        %v1060 = vadd.f32 %v354, %v1059
        %v1061 = vpop.f32.mrf.mxu0
        %1062 = vmatprep.mubr.f32.mxu0 0.0
        %1063 = vmatmul.mubr.f32.gmra.mxu0 %v958
        %v1064 = vpop.f32.mrf.mxu0
        %v1065 = vadd.f32 %v354, %v1064
        %v1066 = vpop.f32.mrf.mxu0
        %1067 = vmatprep.mubr.f32.mxu0 0.0
        %1068 = vmatmul.mubr.f32.gmra.mxu0 %v959
        %v1069 = vpop.f32.mrf.mxu0
        %v1070 = vadd.f32 %v354, %v1069
        %v1071 = vpop.f32.mrf.mxu0
        %1072 = vmatprep.mubr.f32.mxu0 0.0
        %1073 = vmatmul.mubr.f32.gmra.mxu0 %v960
        %v1074 = vpop.f32.mrf.mxu0
        %v1075 = vadd.f32 %v354, %v1074
        %v1076 = vpop.f32.mrf.mxu0
        %1077 = vmatprep.mubr.f32.mxu0 0.0
        %1078 = vmatmul.mubr.f32.gmra.mxu0 %v961
        %v1079 = vpop.f32.mrf.mxu0
        %v1080 = vadd.f32 %v354, %v1079
        %v1081 = vpop.f32.mrf.mxu0
        %1082 = vmatprep.mubr.f32.mxu0 0.0
        %1083 = vmatmul.mubr.f32.gmra.mxu0 %v962
        %v1084 = vpop.f32.mrf.mxu0
        %v1085 = vadd.f32 %v354, %v1084
        %v1086 = vpop.f32.mrf.mxu0
        %1087 = vmatprep.mubr.f32.mxu0 0.0
        %1088 = vmatmul.mubr.f32.gmra.mxu0 %v963
        %v1089 = vpop.f32.mrf.mxu0
        %v1090 = vadd.f32 %v354, %v1089
        %v1091 = vpop.f32.mrf.mxu0
        %1092 = vmatprep.mubr.f32.mxu0 0.0
        %1093 = vmatmul.mubr.f32.gmra.mxu0 %v964
        %v1094 = vpop.f32.mrf.mxu0
        %v1095 = vadd.f32 %v354, %v1094
        %v1096 = vpop.f32.mrf.mxu0
        %1097 = vmatprep.mubr.f32.mxu0 0.0
        %1098 = vmatmul.mubr.f32.gmra.mxu0 %v965
        %v1099 = vpop.f32.mrf.mxu0
        %v1100 = vadd.f32 %v354, %v1099
        %v1101 = vpop.f32.mrf.mxu0
        %1102 = vmatprep.mubr.f32.mxu0 0.0
        %1103 = vmatmul.mubr.f32.gmra.mxu0 %v966
        %v1104 = vpop.f32.mrf.mxu0
        %v1105 = vadd.f32 %v354, %v1104
        %v1106 = vpop.f32.mrf.mxu0
        %1107 = vmatprep.mubr.f32.mxu0 0.0
        %1108 = vmatmul.mubr.f32.gmra.mxu0 %v967
        %v1109 = vpop.f32.mrf.mxu0
        %v1110 = vadd.f32 %v354, %v1109
        %v1111 = vpop.f32.mrf.mxu0
        %1112 = vdwg.mxu0
        %v1113 = vmax.f32 %v1035, 0.0
        %v1114 = vmax.f32 %v1040, 0.0
        %v1115 = vmax.f32 %v1045, 0.0
        %v1116 = vmax.f32 %v1050, 0.0
        %v1117 = vmax.f32 %v1055, 0.0
        %v1118 = vmax.f32 %v1060, 0.0
        %v1119 = vmax.f32 %v1065, 0.0
        %v1120 = vmax.f32 %v1070, 0.0
        %v1121 = vmax.f32 %v1075, 0.0
        %v1122 = vmax.f32 %v1080, 0.0
        %v1123 = vmax.f32 %v1085, 0.0
        %v1124 = vmax.f32 %v1090, 0.0
        %v1125 = vmax.f32 %v1095, 0.0
        %v1126 = vmax.f32 %v1100, 0.0
        %v1127 = vmax.f32 %v1105, 0.0
        %v1128 = vmax.f32 %v1110, 0.0
        %v1129 = vmax.f32 %v1113, %v1117
        %v1130 = vmax.f32 %v1114, %v1118
        %v1131 = vmax.f32 %v1115, %v1119
        %v1132 = vmax.f32 %v1116, %v1120
        %v1133 = vmax.f32 %v1129, %v1121
        %v1134 = vmax.f32 %v1130, %v1122
        %v1135 = vmax.f32 %v1131, %v1123
        %v1136 = vmax.f32 %v1132, %v1124
        %v1137 = vmax.f32 %v1133, %v1125
        %v1138 = vmax.f32 %v1134, %v1126
        %v1139 = vmax.f32 %v1135, %v1127
        %v1140 = vmax.f32 %v1136, %v1128
        %v1141 = vmax.f32 %v1137, %v1138
        %v1142 = vmax.f32 %v1139, %v1140
        %v1143 = vmax.f32 %v1141, %v1142
        %v1144 = vrot.slane %v1143, 4
        %v1145 = vmax.f32 %v1143, %v1144
        %v1146 = vrot.slane %v1145, 2
        %v1147 = vmax.f32 %v1145, %v1146
        %v1148 = vrot.slane %v1147, 1
        %v1149 = vmax.f32 %v1147, %v1148
        %v1150 = vmax.f32 %v715, %v719
        %v1151 = vmax.f32 %v716, %v720
        %v1152 = vmax.f32 %v717, %v721
        %v1153 = vmax.f32 %v718, %v722
        %v1154 = vmax.f32 %v1150, %v723
        %v1155 = vmax.f32 %v1151, %v724
        %v1156 = vmax.f32 %v1152, %v725
        %v1157 = vmax.f32 %v1153, %v726
        %v1158 = vmax.f32 %v1154, %v727
        %v1159 = vmax.f32 %v1155, %v728
        %v1160 = vmax.f32 %v1156, %v729
        %v1161 = vmax.f32 %v1157, %v730
        %v1162 = vmax.f32 %v1158, %v1159
        %v1163 = vmax.f32 %v1160, %v1161
        %v1164 = vmax.f32 %v1162, %v1163
        %v1165 = vrot.slane %v1164, 4
        %v1166 = vmax.f32 %v1164, %v1165
        %v1167 = vrot.slane %v1166, 2
        %v1168 = vmax.f32 %v1166, %v1167
        %v1169 = vrot.slane %v1168, 1
        %v1170 = vmax.f32 %v1168, %v1169
        %1171 = vmatprep.subr.mxu0 0.0
        %1172 = vmatpush1.msra.mxu0 %v333
        %1173 = vmatprep.subr.mxu0 0.0
        %1174 = vmatpush1.msra.mxu0 %v332
        %1175 = vmatprep.subr.mxu0 0.0
        %1176 = vmatpush1.msra.mxu0 %v331
        %1177 = vmatprep.subr.mxu0 0.0
        %1178 = vmatpush1.msra.mxu0 %v330
        %1179 = vmatprep.subr.mxu0 0.0
        %1180 = vmatpush1.msra.mxu0 %v329
        %1181 = vmatprep.subr.mxu0 0.0
        %1182 = vmatpush1.msra.mxu0 %v328
        %1183 = vmatprep.subr.mxu0 0.0
        %1184 = vmatpush1.msra.mxu0 %v327
        %1185 = vmatprep.subr.mxu0 0.0
        %1186 = vmatpush1.msra.mxu0 %v326
        %1187 = vmatprep.subr.mxu0 0.0
        %1188 = vmatpush1.msra.mxu0 %v325
        %1189 = vmatprep.subr.mxu0 0.0
        %1190 = vmatpush1.msra.mxu0 %v324
        %1191 = vmatprep.subr.mxu0 0.0
        %1192 = vmatpush1.msra.mxu0 %v323
        %1193 = vmatprep.subr.mxu0 0.0
        %1194 = vmatpush1.msra.mxu0 %v322
        %1195 = vmatprep.subr.mxu0 0.0
        %1196 = vmatpush1.msra.mxu0 %v321
        %1197 = vmatprep.subr.mxu0 0.0
        %1198 = vmatpush1.msra.mxu0 %v320
        %1199 = vmatprep.subr.mxu0 0.0
        %1200 = vmatpush1.msra.mxu0 %v319
        %1201 = vmatprep.subr.mxu0 0.0
        %1202 = vmatpush1.msra.mxu0 %v318
        %1203 = vmatprep.subr.mxu0 0.0
        %1204 = vmatpush2.msra.mxu0 0.0
        %1205 = vmatprep.subr.mxu0 0.0
        %1206 = vmatpush2.msra.mxu0 0.0
        %1207 = vmatprep.subr.mxu0 0.0
        %1208 = vmatpush2.msra.mxu0 0.0
        %1209 = vmatprep.subr.mxu0 0.0
        %1210 = vmatpush2.msra.mxu0 0.0
        %1211 = vmatprep.subr.mxu0 0.0
        %1212 = vmatpush2.msra.mxu0 0.0
        %1213 = vmatprep.subr.mxu0 0.0
        %1214 = vmatpush2.msra.mxu0 0.0
        %1215 = vmatprep.subr.mxu0 0.0
        %1216 = vmatpush2.msra.mxu0 0.0
        %1217 = vmatprep.subr.mxu0 0.0
        %1218 = vmatpush2.msra.mxu0 0.0
        %1219 = vmatprep.subr.mxu0 0.0
        %1220 = vmatpush2.msra.mxu0 0.0
        %1221 = vmatprep.subr.mxu0 0.0
        %1222 = vmatpush2.msra.mxu0 0.0
        %1223 = vmatprep.subr.mxu0 0.0
        %1224 = vmatpush2.msra.mxu0 0.0
        %1225 = vmatprep.subr.mxu0 0.0
        %1226 = vmatpush2.msra.mxu0 0.0
        %1227 = vmatprep.subr.mxu0 0.0
        %1228 = vmatpush2.msra.mxu0 0.0
        %1229 = vmatprep.subr.mxu0 0.0
        %1230 = vmatpush2.msra.mxu0 0.0
        %1231 = vmatprep.subr.mxu0 0.0
        %1232 = vmatpush2.msra.mxu0 0.0
        %1233 = vmatprep.subr.mxu0 0.0
        %1234 = vmatpush2.msra.mxu0 0.0
        %1235 = vmatprep.mubr.f32.mxu0 0.0
        %1236 = vmatmul.mubr.f32.gmra.mxu0 %v1149
        %v1237 = vpop.f32.mrf.mxu0
        %v1238 = vadd.f32 %v355, %v1237
        %v1239 = vpop.f32.mrf.mxu0
        %1240 = vdwg.mxu0
        %1241 = vmatprep.subr.mxu0 0.0
        %1242 = vmatpush1.msra.mxu0 %v349
        %1243 = vmatprep.subr.mxu0 0.0
        %1244 = vmatpush1.msra.mxu0 %v348
        %1245 = vmatprep.subr.mxu0 0.0
        %1246 = vmatpush1.msra.mxu0 %v347
        %1247 = vmatprep.subr.mxu0 0.0
        %1248 = vmatpush1.msra.mxu0 %v346
        %1249 = vmatprep.subr.mxu0 0.0
        %1250 = vmatpush1.msra.mxu0 %v345
        %1251 = vmatprep.subr.mxu0 0.0
        %1252 = vmatpush1.msra.mxu0 %v344
        %1253 = vmatprep.subr.mxu0 0.0
        %1254 = vmatpush1.msra.mxu0 %v343
        %1255 = vmatprep.subr.mxu0 0.0
        %1256 = vmatpush1.msra.mxu0 %v342
        %1257 = vmatprep.subr.mxu0 0.0
        %1258 = vmatpush1.msra.mxu0 %v341
        %1259 = vmatprep.subr.mxu0 0.0
        %1260 = vmatpush1.msra.mxu0 %v340
        %1261 = vmatprep.subr.mxu0 0.0
        %1262 = vmatpush1.msra.mxu0 %v339
        %1263 = vmatprep.subr.mxu0 0.0
        %1264 = vmatpush1.msra.mxu0 %v338
        %1265 = vmatprep.subr.mxu0 0.0
        %1266 = vmatpush1.msra.mxu0 %v337
        %1267 = vmatprep.subr.mxu0 0.0
        %1268 = vmatpush1.msra.mxu0 %v336
        %1269 = vmatprep.subr.mxu0 0.0
        %1270 = vmatpush1.msra.mxu0 %v335
        %1271 = vmatprep.subr.mxu0 0.0
        %1272 = vmatpush1.msra.mxu0 %v334
        %1273 = vmatprep.subr.mxu0 0.0
        %1274 = vmatpush2.msra.mxu0 0.0
        %1275 = vmatprep.subr.mxu0 0.0
        %1276 = vmatpush2.msra.mxu0 0.0
        %1277 = vmatprep.subr.mxu0 0.0
        %1278 = vmatpush2.msra.mxu0 0.0
        %1279 = vmatprep.subr.mxu0 0.0
        %1280 = vmatpush2.msra.mxu0 0.0
        %1281 = vmatprep.subr.mxu0 0.0
        %1282 = vmatpush2.msra.mxu0 0.0
        %1283 = vmatprep.subr.mxu0 0.0
        %1284 = vmatpush2.msra.mxu0 0.0
        %1285 = vmatprep.subr.mxu0 0.0
        %1286 = vmatpush2.msra.mxu0 0.0
        %1287 = vmatprep.subr.mxu0 0.0
        %1288 = vmatpush2.msra.mxu0 0.0
        %1289 = vmatprep.subr.mxu0 0.0
        %1290 = vmatpush2.msra.mxu0 0.0
        %1291 = vmatprep.subr.mxu0 0.0
        %1292 = vmatpush2.msra.mxu0 0.0
        %1293 = vmatprep.subr.mxu0 0.0
        %1294 = vmatpush2.msra.mxu0 0.0
        %1295 = vmatprep.subr.mxu0 0.0
        %1296 = vmatpush2.msra.mxu0 0.0
        %1297 = vmatprep.subr.mxu0 0.0
        %1298 = vmatpush2.msra.mxu0 0.0
        %1299 = vmatprep.subr.mxu0 0.0
        %1300 = vmatpush2.msra.mxu0 0.0
        %1301 = vmatprep.subr.mxu0 0.0
        %1302 = vmatpush2.msra.mxu0 0.0
        %1303 = vmatprep.subr.mxu0 0.0
        %1304 = vmatpush2.msra.mxu0 0.0
        %1305 = vmatprep.mubr.f32.mxu0 0.0
        %1306 = vmatmul.mubr.f32.gmra.mxu0 %v1170
        %v1307 = vpop.f32.mrf.mxu0
        %v1308 = vadd.f32 %v356, %v1307
        %v1309 = vpop.f32.mrf.mxu0
        %1310 = vdwg.mxu0
        %v1311 = vmul.f32 %v1238, %v1238
        %vm1312 = vcmask 24576
        %v1313 = vsel %vm1312, %v1311, 0.0
        %1314 = vadd.xlane.f32.xlu0 %v1313
        %v1315 = vpop.xlane.xlu0 %1314
        %v1316 = vrsqrt.pop %v1315
        %v1317 = vmul.f32 %v1315, %v1316
        %vm1318 = vcmp.eq.f32.partialorder %v1315, inf
        %v1319 = vsel %vm1318, %v1315, %v1317
        %vm1320 = vcmp.eq.f32.partialorder %v1315, 0.0
        %v1321 = vand.u32 %v1315, 2147483648
        %v1322 = vsel %vm1320, %v1321, %v1319
        %1324 = vrot.lane.b32.xlu0 %v1311, 124
        %v1325 = vpop.permute.xlu0 %1324
        %v1327 = vsel %vm1312, %v1325, 0.0
        %1328 = vadd.xlane.f32.xlu0 %v1327
        %v1329 = vpop.xlane.xlu0 %1328
        %v1330 = vrsqrt.pop %v1329
        %v1331 = vmul.f32 %v1329, %v1330
        %vm1332 = vcmp.eq.f32.partialorder %v1329, inf
        %v1333 = vsel %vm1332, %v1329, %v1331
        %vm1334 = vcmp.eq.f32.partialorder %v1329, 0.0
        %v1335 = vand.u32 %v1329, 2147483648
        %v1336 = vsel %vm1334, %v1335, %v1333
        %v1337 = vlaneseq
        %v1338 = vand.u32 %v1337, 127
        %vm1339 = vcmp.lt.s32.totalorder %v1338, 4
        %v1340 = vadd.f32 %v1322, 1e-06
        %v1341 = vrcp.pop %v1340
        %v1342 = vmul.f32 1.0, %v1341
        %v1343 = vadd.f32 %v1336, 1e-06
        %v1344 = vrcp.pop %v1343
        %v1345 = vmul.f32 1.0, %v1344
        %v1346 = vsel %vm1339, %v1342, %v1345
        %v1347 = vmul.f32 %v1238, %v1346
        %v1348 = vlaneseq
        %v1349 = vshrl.u32 %v1348, 7
        %vm1350 = vcmp.eq.s32.totalorder %v1338, %v1349
        %v1351 = vsel %vm1350, 1, 0
        %v1352 = vcvt.s32.f32 %v1351
        %v1354 = vsel %vm213, %v252, 0
        %v1357 = vsel %vm405, %v1352, 0
        %1359 = vmatprep.subr.mxu0 0.0
        %1360 = vmatpush1.msra.mxu0 0.0
        %1361 = vmatprep.subr.mxu0 0.0
        %1362 = vmatpush1.msra.mxu0 0.0
        %1363 = vmatprep.subr.mxu0 0.0
        %1364 = vmatpush1.msra.mxu0 0.0
        %1365 = vmatprep.subr.mxu0 0.0
        %1366 = vmatpush1.msra.mxu0 0.0
        %1367 = vmatprep.subr.mxu0 0.0
        %1368 = vmatpush1.msra.mxu0 0.0
        %1369 = vmatprep.subr.mxu0 0.0
        %1370 = vmatpush1.msra.mxu0 0.0
        %1371 = vmatprep.subr.mxu0 0.0
        %1372 = vmatpush1.msra.mxu0 0.0
        %1373 = vmatprep.subr.mxu0 0.0
        %1374 = vmatpush1.msra.mxu0 0.0
        %1375 = vmatprep.subr.mxu0 0.0
        %1376 = vmatpush1.msra.mxu0 0.0
        %1377 = vmatprep.subr.mxu0 0.0
        %1378 = vmatpush1.msra.mxu0 0.0
        %1379 = vmatprep.subr.mxu0 0.0
        %1380 = vmatpush1.msra.mxu0 0.0
        %1381 = vmatprep.subr.mxu0 0.0
        %1382 = vmatpush1.msra.mxu0 0.0
        %1383 = vmatprep.subr.mxu0 0.0
        %1384 = vmatpush1.msra.mxu0 0.0
        %1385 = vmatprep.subr.mxu0 0.0
        %1386 = vmatpush1.msra.mxu0 0.0
        %1387 = vmatprep.subr.mxu0 0.0
        %1388 = vmatpush1.msra.mxu0 0.0
        %1389 = vmatprep.subr.mxu0 0.0
        %1390 = vmatpush1.msra.mxu0 %v1357
        %1391 = vmatprep.subr.mxu0 0.0
        %1392 = vmatpush2.msra.mxu0 0.0
        %1393 = vmatprep.subr.mxu0 0.0
        %1394 = vmatpush2.msra.mxu0 0.0
        %1395 = vmatprep.subr.mxu0 0.0
        %1396 = vmatpush2.msra.mxu0 0.0
        %1397 = vmatprep.subr.mxu0 0.0
        %1398 = vmatpush2.msra.mxu0 0.0
        %1399 = vmatprep.subr.mxu0 0.0
        %1400 = vmatpush2.msra.mxu0 0.0
        %1401 = vmatprep.subr.mxu0 0.0
        %1402 = vmatpush2.msra.mxu0 0.0
        %1403 = vmatprep.subr.mxu0 0.0
        %1404 = vmatpush2.msra.mxu0 0.0
        %1405 = vmatprep.subr.mxu0 0.0
        %1406 = vmatpush2.msra.mxu0 0.0
        %1407 = vmatprep.subr.mxu0 0.0
        %1408 = vmatpush2.msra.mxu0 0.0
        %1409 = vmatprep.subr.mxu0 0.0
        %1410 = vmatpush2.msra.mxu0 0.0
        %1411 = vmatprep.subr.mxu0 0.0
        %1412 = vmatpush2.msra.mxu0 0.0
        %1413 = vmatprep.subr.mxu0 0.0
        %1414 = vmatpush2.msra.mxu0 0.0
        %1415 = vmatprep.subr.mxu0 0.0
        %1416 = vmatpush2.msra.mxu0 0.0
        %1417 = vmatprep.subr.mxu0 0.0
        %1418 = vmatpush2.msra.mxu0 0.0
        %1419 = vmatprep.subr.mxu0 0.0
        %1420 = vmatpush2.msra.mxu0 0.0
        %1421 = vmatprep.subr.mxu0 0.0
        %1422 = vmatpush2.msra.mxu0 0.0
        %1423 = vmatprep.mubr.f32.mxu0 0.0
        %1424 = vmatmul.mubr.f32.gmra.mxu0 %v1354
        %v1425 = vpop.f32.mrf.mxu0
        %v1426 = vadd.f32 0.0, %v1425
        %v1427 = vpop.f32.mrf.mxu0
        %1428 = vdwg.mxu0
        %v1429 = vadd.f32 %v1308, %v1426
        %1430 = vst [vmem:[%s192] sm:$0xff] %v858
        %1431 = vst [vmem:[%s192 + $0x8] sm:$0xff] %v864
        %1432 = vst [vmem:[%s192 + $0x10] sm:$0xff] %v870
        %1433 = vst [vmem:[%s192 + $0x18] sm:$0xff] %v876
        %1434 = vst [vmem:[%s192 + $0x20] sm:$0xff] %v882
        %1435 = vst [vmem:[%s192 + $0x28] sm:$0xff] %v888
        %1436 = vst [vmem:[%s192 + $0x30] sm:$0xff] %v894
        %1437 = vst [vmem:[%s192 + $0x38] sm:$0xff] %v900
        %1438 = vst [vmem:[%s192 + $0x40] sm:$0xff] %v906
        %1439 = vst [vmem:[%s192 + $0x48] sm:$0xff] %v912
        %1440 = vst [vmem:[%s192 + $0x50] sm:$0xff] %v918
        %1441 = vst [vmem:[%s192 + $0x58] sm:$0xff] %v924
        %1442 = vst [vmem:[%s192 + $0x60] sm:$0xff] %v930
        %1443 = vst [vmem:[%s192 + $0x68] sm:$0xff] %v936
        %1444 = vst [vmem:[%s192 + $0x70] sm:$0xff] %v942
        %1445 = vst [vmem:[%s192 + $0x78] sm:$0xff] %v948
        %vm1446 = vcmp.eq.s32.totalorder %v1349, 0
        %vm1447 = vcmp.eq.s32.totalorder %v1349, 1
        %v1448 = vlaneseq
        %v1449 = vshrl.u32 %v1448, 7
        %v1450 = vsub.s32 0, %v1449
        %v1451 = vrot.slane %v1429, %v1450
        %v1452 = vsel %vm1447, %v1451, 0.0
        %v1453 = vlaneseq
        %v1454 = vshrl.u32 %v1453, 7
        %v1455 = vsub.s32 0, %v1454
        %v1456 = vrot.slane %v1347, %v1455
        %v1457 = vsel %vm1446, %v1456, %v1452
        %1458 = vst [vmem:[%s196] sm:$0xff] %v1457
        %p1459 = scmp.lt.s32.totalorder %s16, 1
        %s1460 = scalar_select %p1459, %s16, 1
        %s1461 = smul.addr %s1460, 16
        %s1462 = smul.addr %s1461, 8
        %s1463 = scalar_lea.vmem %s2, %s1462
        %p1464 = scmp.lt.s32.totalorder %s16, 1
        %s1465 = scalar_select %p1464, %s16, 1
        %s1466 = smul.addr %s1465, 8
        %s1467 = scalar_lea.vmem %s3, %s1466
        // Predicated region
        $region33: #{cat_posenet.1} parent=27 // pred_check
          %p1468 = pneg %p81
        $region34: #{cat_posenet.1} parent=27 // pred_check_branch
          %1470 = sbr.rel (%p1468) target = $region36
        $region35: #{cat_posenet.1} parent=27 // pred_region
          _
        $region36: #{cat_posenet.1} parent=27 // pred_fallthru
          _
        // Predicated region
        $region37: #{cat_posenet.1} parent=27 // pred_check
          %p1471 = pneg %p107
        $region38: #{cat_posenet.1} parent=27 // pred_check_branch
          %1473 = sbr.rel (%p1471) target = $region40
        $region39: #{cat_posenet.1} parent=27 // pred_region
          _
        $region40: #{cat_posenet.1} parent=27 // pred_fallthru
          _
      $region28: #{cat_posenet.1} parent=5 // pred_fallthru
        _
      %p1474 = scmp.le.s32.totalorder 2, %s11
      // Predicated region
      $region41: #{cat_posenet.1} parent=5 // pred_check
        %p1475 = pneg %p1474
      $region42: #{cat_posenet.1} parent=5 // pred_check_branch
        %1477 = sbr.rel (%p1475) target = $region44
      $region43: #{cat_posenet.1} parent=5 // pred_region
        %s1478 = ssub.s32 %s11, 2
        // Predicated region
        $region45: #{cat_posenet.1} parent=43 // pred_check
          %p1479 = pneg %p87
        $region46: #{cat_posenet.1} parent=43 // pred_check_branch
          %1481 = sbr.rel (%p1479) target = $region48
        $region47: #{cat_posenet.1} parent=43 // pred_region
          %p1482 = scmp.lt.s32.totalorder %s17, 1
          %s1483 = scalar_select %p1482, %s17, 1
          %s1484 = smul.addr %s1483, 16
          %s1485 = smul.addr %s1484, 8
          %s1486 = scalar_lea.vmem %s2, %s1485
        $region48: #{cat_posenet.1} parent=43 // pred_fallthru
          _
        // Predicated region
        $region49: #{cat_posenet.1} parent=43 // pred_check
          %p1487 = pneg %p113
        $region50: #{cat_posenet.1} parent=43 // pred_check_branch
          %1489 = sbr.rel (%p1487) target = $region52
        $region51: #{cat_posenet.1} parent=43 // pred_region
          %p1490 = scmp.lt.s32.totalorder %s17, 1
          %s1491 = scalar_select %p1490, %s17, 1
          %s1492 = smul.addr %s1491, 8
          %s1493 = scalar_lea.vmem %s3, %s1492
        $region52: #{cat_posenet.1} parent=43 // pred_fallthru
          _
      $region44: #{cat_posenet.1} parent=5 // pred_fallthru
        _
    $region6: #{cat_posenet.1} parent=1 // loop_footer
      %s15 = sadd.s32 1, %s11
    $region7: #{cat_posenet.1} parent=1 // loop_footer_branch
      %10 = sbr.rel target = $region3
    $region8: #{cat_posenet.1} parent=1 // loop_exit
      _
    %1494 = vsyncpa [#allocation3], 1
    %s1495 = scalar_lea.sflag [#allocation3], 1
    %1496 = vsyncpa %s1495, 1

</llo_original>
